<compile_context>
chip_gen: v7x
topology: tpu7x:2x2x1
jax: 0.10.0
libtpu: 0.0.40
codegen_flags: <defaults>
</compile_context>

<pallas_src>
import jax
import jax.numpy as jnp
from jax.experimental import pallas as pl
from jax.experimental.pallas import tpu as pltpu

IN_FEATURES = 28 * 28   # 784
HIDDEN = 800
HIDDEN_PAD = 1024       # MXU / lane friendly (multiple of 256)
OUT = 10
OUT_PAD = 128           # lane-dense output width
MAX_TILE_B = 512        # fits comfortably in scoped VMEM on v5e/v6e/v7x


def _mlp_kernel(x_ref, w1_ref, b1_ref, w2_ref, b2_ref, o_ref):
    # x_ref:  (TILE_B, 784)   bf16      w1_ref: (784, 1024)  bf16
    # b1_ref: (1, 1024)       f32       w2_ref: (1024, 128)  bf16
    # b2_ref: (1, 128)        f32       o_ref:  (TILE_B, 128) f32
    h = jnp.dot(x_ref[...], w1_ref[...], preferred_element_type=jnp.float32)
    h = jnp.maximum(h + b1_ref[...], 0.0)                      # ReLU in f32
    out = jnp.dot(h.astype(jnp.bfloat16), w2_ref[...],
                  preferred_element_type=jnp.float32) + b2_ref[...]
    o_ref[...] = out.astype(o_ref.dtype)


def _round_up(x, m):
    return (x + m - 1) // m * m


@jax.jit
def student_model_forward(inputs, w1, b1, w2, b2):
    """Forward pass.

    inputs: any shape that flattens to (-1, 784), e.g. (B, 1, 28, 28)
    w1: (784, 800)  b1: (800,)   w2: (800, 10)  b2: (10,)
      (weights stored transposed vs torch: (in_features, out_features))
    returns: (B, 10) float32 logits
    """
    x = inputs.reshape(-1, IN_FEATURES)
    B = x.shape[0]

    # --- wrapper-side weight prep: bf16 cast + zero-pad to MXU-friendly dims ---
    w1p = jnp.zeros((IN_FEATURES, HIDDEN_PAD), jnp.bfloat16)
    w1p = w1p.at[:, :HIDDEN].set(w1.astype(jnp.bfloat16))
    b1p = jnp.zeros((1, HIDDEN_PAD), jnp.float32)
    b1p = b1p.at[:, :HIDDEN].set(b1.reshape(1, -1).astype(jnp.float32))
    w2p = jnp.zeros((HIDDEN_PAD, OUT_PAD), jnp.bfloat16)
    w2p = w2p.at[:HIDDEN, :OUT].set(w2.astype(jnp.bfloat16))
    b2p = jnp.zeros((1, OUT_PAD), jnp.float32)
    b2p = b2p.at[:, :OUT].set(b2.reshape(1, -1).astype(jnp.float32))

    # --- batch tiling: pad B so the grid divides evenly (16-row bf16 sublanes) ---
    tile_b = min(MAX_TILE_B, _round_up(B, 16))
    b_pad = _round_up(B, tile_b)
    xp = jnp.zeros((b_pad, IN_FEATURES), jnp.bfloat16)
    xp = xp.at[:B].set(x.astype(jnp.bfloat16))

    grid = (b_pad // tile_b,)
    flops = 2 * b_pad * (IN_FEATURES * HIDDEN_PAD + HIDDEN_PAD * OUT_PAD)
    bytes_accessed = (xp.size * 2 + w1p.size * 2 + w2p.size * 2
                      + b1p.size * 4 + b2p.size * 4 + b_pad * OUT_PAD * 4)

    out = pl.pallas_call(
        _mlp_kernel,
        out_shape=jax.ShapeDtypeStruct((b_pad, OUT_PAD), jnp.float32),
        grid_spec=pltpu.PrefetchScalarGridSpec(
            num_scalar_prefetch=0,
            grid=grid,
            in_specs=[
                # x: one batch tile per grid step (double-buffered by Pallas)
                pl.BlockSpec((tile_b, IN_FEATURES), lambda i: (i, 0)),
                # weights / biases: constant block index -> VMEM-resident
                pl.BlockSpec((IN_FEATURES, HIDDEN_PAD), lambda i: (0, 0)),
                pl.BlockSpec((1, HIDDEN_PAD), lambda i: (0, 0)),
                pl.BlockSpec((HIDDEN_PAD, OUT_PAD), lambda i: (0, 0)),
                pl.BlockSpec((1, OUT_PAD), lambda i: (0, 0)),
            ],
            out_specs=pl.BlockSpec((tile_b, OUT_PAD), lambda i: (i, 0)),
        ),
        compiler_params=pltpu.CompilerParams(
            dimension_semantics=("parallel",),  # megacore-shard batch on v7x
        ),
        cost_estimate=pl.CostEstimate(
            flops=flops, transcendentals=0, bytes_accessed=bytes_accessed),
    )(xp, w1p, b1p, w2p, b2p)

    return out[:B, :OUT]


def init_params(key):
    """Deterministic init matching nn.Linear's U(-1/sqrt(fan_in), 1/sqrt(fan_in))."""
    k1, k2, k3, k4 = jax.random.split(key, 4)
    fan1 = IN_FEATURES
    fan2 = HIDDEN
    lim1 = 1.0 / jnp.sqrt(fan1)
    lim2 = 1.0 / jnp.sqrt(fan2)
    # stored as (in_features, out_features)  (i.e. torch weight transposed)
    w1 = jax.random.uniform(k1, (fan1, HIDDEN), jnp.float32, -lim1, lim1)
    b1 = jax.random.uniform(k2, (HIDDEN,), jnp.float32, -lim1, lim1)
    w2 = jax.random.uniform(k3, (fan2, OUT), jnp.float32, -lim2, lim2)
    b2 = jax.random.uniform(k4, (OUT,), jnp.float32, -lim2, lim2)
    return w1, b1, w2, b2


if __name__ == "__main__":
    key = jax.random.PRNGKey(0)
    pkey, xkey = jax.random.split(key)
    w1, b1, w2, b2 = init_params(pkey)

    # Small MNIST-like batch, NCHW as the PyTorch module expects.
    x = jax.random.normal(xkey, (2, 1, 28, 28), jnp.float32)

    out = student_model_forward(x, w1, b1, w2, b2)
    jax.block_until_ready(out)
    assert out.shape == (2, 10)

    # Reference with the same bf16 input/weight quantization (f32 accumulate),
    # so the comparison validates the kernel's math itself.
    xf = x.reshape(-1, IN_FEATURES).astype(jnp.bfloat16).astype(jnp.float32)
    w1f = w1.astype(jnp.bfloat16).astype(jnp.float32)
    w2f = w2.astype(jnp.bfloat16).astype(jnp.float32)
    h_ref = jnp.maximum(xf @ w1f + b1, 0.0)
    ref = h_ref.astype(jnp.bfloat16).astype(jnp.float32) @ w2f + b2
    assert jnp.allclose(out, ref, atol=2e-2, rtol=2e-2), (
        f"max abs err {jnp.max(jnp.abs(out - ref))}")

    print("KERNEL_OK")
</pallas_src>

<mosaic_0001>
module attributes {stable_mosaic.version = 11 : i64} {
  func.func @_mlp_kernel(%arg0: i32, %arg1: memref<16x784xbf16, #tpu.memory_space<vmem>>, %arg2: memref<784x1024xbf16, #tpu.memory_space<vmem>>, %arg3: memref<1x1024xf32, #tpu.memory_space<vmem>>, %arg4: memref<1024x128xbf16, #tpu.memory_space<vmem>>, %arg5: memref<1x128xf32, #tpu.memory_space<vmem>>, %arg6: memref<16x128xf32, #tpu.memory_space<vmem>>) attributes {dimension_semantics = [#tpu.dimension_semantics<parallel>], iteration_bounds = array<i64: 1>, scalar_prefetch = 0 : i64, scratch_operands = 0 : i64, tpu.core_type = #tpu.core_type<tc>, window_params = [{transform_indices = @transform_0, window_bounds = array<i64: 16, 784>}, {pipeline_mode = #tpu.pipeline_mode<synchronous>, transform_indices = @transform_1, window_bounds = array<i64: 784, 1024>}, {pipeline_mode = #tpu.pipeline_mode<synchronous>, transform_indices = @transform_2, window_bounds = array<i64: 1, 1024>}, {pipeline_mode = #tpu.pipeline_mode<synchronous>, transform_indices = @transform_3, window_bounds = array<i64: 1024, 128>}, {pipeline_mode = #tpu.pipeline_mode<synchronous>, transform_indices = @transform_4, window_bounds = array<i64: 1, 128>}, {transform_indices = @transform_5, window_bounds = array<i64: 16, 128>}]} {
    %c0 = arith.constant 0 : index
    %c0_0 = arith.constant 0 : index
    %0 = vector.load %arg1[%c0, %c0_0] : memref<16x784xbf16, #tpu.memory_space<vmem>>, vector<16x784xbf16>
    %c0_1 = arith.constant 0 : index
    %c0_2 = arith.constant 0 : index
    %1 = vector.load %arg2[%c0_1, %c0_2] : memref<784x1024xbf16, #tpu.memory_space<vmem>>, vector<784x1024xbf16>
    %cst = arith.constant dense<0.000000e+00> : vector<16x1024xf32>
    %2 = tpu.matmul %0, %1, %cst {dimension_numbers = #tpu.dot_dimension_numbers<[1], [0], [0], [1], [0, 0, 1, 1], [], []>} : vector<16x784xbf16>, vector<784x1024xbf16>, vector<16x1024xf32> -> vector<16x1024xf32>
    %c0_3 = arith.constant 0 : index
    %c0_4 = arith.constant 0 : index
    %3 = vector.load %arg3[%c0_3, %c0_4] : memref<1x1024xf32, #tpu.memory_space<vmem>>, vector<1x1024xf32>
    %4 = vector.broadcast %3 : vector<1x1024xf32> to vector<16x1024xf32>
    %5 = arith.addf %2, %4 : vector<16x1024xf32>
    %cst_5 = arith.constant 0.000000e+00 : f32
    %6 = vector.broadcast %cst_5 : f32 to vector<16x1024xf32>
    %7 = arith.maximumf %5, %6 : vector<16x1024xf32>
    %8 = arith.truncf %7 : vector<16x1024xf32> to vector<16x1024xbf16>
    %c0_6 = arith.constant 0 : index
    %c0_7 = arith.constant 0 : index
    %9 = vector.load %arg4[%c0_6, %c0_7] : memref<1024x128xbf16, #tpu.memory_space<vmem>>, vector<1024x128xbf16>
    %cst_8 = arith.constant dense<0.000000e+00> : vector<16x128xf32>
    %10 = tpu.matmul %8, %9, %cst_8 {dimension_numbers = #tpu.dot_dimension_numbers<[1], [0], [0], [1], [0, 0, 1, 1], [], []>} : vector<16x1024xbf16>, vector<1024x128xbf16>, vector<16x128xf32> -> vector<16x128xf32>
    %c0_9 = arith.constant 0 : index
    %c0_10 = arith.constant 0 : index
    %11 = vector.load %arg5[%c0_9, %c0_10] : memref<1x128xf32, #tpu.memory_space<vmem>>, vector<1x128xf32>
    %12 = vector.broadcast %11 : vector<1x128xf32> to vector<16x128xf32>
    %13 = arith.addf %10, %12 : vector<16x128xf32>
    %c0_11 = arith.constant 0 : index
    %c0_12 = arith.constant 0 : index
    %14 = vector.load %arg6[%c0_11, %c0_12] : memref<16x128xf32, #tpu.memory_space<vmem>>, vector<16x128xf32>
    tpu.vector_store %arg6[%c0_11, %c0_12], %13 {strides = array<i32>} : memref<16x128xf32, #tpu.memory_space<vmem>>, vector<16x128xf32>,
    return
  }
  func.func @transform_0(%arg0: i32) -> (i32, i32) {
    %c0_i32 = arith.constant 0 : i32
    %c0_i32_0 = arith.constant 0 : i32
    return %arg0, %c0_i32 : i32, i32
  }
  func.func @transform_1(%arg0: i32) -> (i32, i32) {
    %c0_i32 = arith.constant 0 : i32
    %c0_i32_0 = arith.constant 0 : i32
    %c0_i32_1 = arith.constant 0 : i32
    return %c0_i32, %c0_i32_0 : i32, i32
  }
  func.func @transform_2(%arg0: i32) -> (i32, i32) {
    %c0_i32 = arith.constant 0 : i32
    %c0_i32_0 = arith.constant 0 : i32
    %c0_i32_1 = arith.constant 0 : i32
    return %c0_i32, %c0_i32_0 : i32, i32
  }
  func.func @transform_3(%arg0: i32) -> (i32, i32) {
    %c0_i32 = arith.constant 0 : i32
    %c0_i32_0 = arith.constant 0 : i32
    %c0_i32_1 = arith.constant 0 : i32
    return %c0_i32, %c0_i32_0 : i32, i32
  }
  func.func @transform_4(%arg0: i32) -> (i32, i32) {
    %c0_i32 = arith.constant 0 : i32
    %c0_i32_0 = arith.constant 0 : i32
    %c0_i32_1 = arith.constant 0 : i32
    return %c0_i32, %c0_i32_0 : i32, i32
  }
  func.func @transform_5(%arg0: i32) -> (i32, i32) {
    %c0_i32 = arith.constant 0 : i32
    %c0_i32_0 = arith.constant 0 : i32
    return %arg0, %c0_i32 : i32, i32
  }
}

</mosaic_0001>

<llo_original>
// kernel: student_model_forward.1
$region0: #{student_model_forward.1}
  #allocation0 [shape = 'u32[]', space=smem, size = 0x4, offset = 0x4, fixed_abs, tag = 'smem constant byte address 0x4 - core index']
  #allocation1 [shape = 'u32[144,128]{1,0:T(1,128)}', space=vmem, size = 0x12000, scoped, tag = 'internal scratch']
  %s0 = inlined_call_operand.vmem [shape: bf16[16,784], index: 0, kind: input, shape index: {}]
  %s1 = inlined_call_operand.vmem [shape: bf16[784,1024], index: 1, kind: input, shape index: {}]
  %s2 = inlined_call_operand.vmem [shape: f32[1,1024], index: 2, kind: input, shape index: {}]
  %s3 = inlined_call_operand.vmem [shape: bf16[1024,128], index: 3, kind: input, shape index: {}]
  %s4 = inlined_call_operand.vmem [shape: f32[1,128], index: 4, kind: input, shape index: {}]
  %s5 = inlined_call_operand.vmem [shape: f32[16,128], index: 5, kind: output, shape index: {}]
  %s6 = sld [smem:[#allocation0]]
  $region30: #{student_model_forward.1} parent=0
    _
  %s8 = ssub.s32 1, %s6
  %s9 = scalar_select 0, %s8, %s6
  // Predicated region
  $region2: #{student_model_forward.1} parent=0 // pred_check
    _
  $region3: #{student_model_forward.1} parent=0 // pred_check_branch
    %11 = sbr.rel (0) target = $region5
  $region4: #{student_model_forward.1} parent=0 // pred_region
    _
  $region5: #{student_model_forward.1} parent=0 // pred_fallthru
    _
  // Predicated region
  $region6: #{student_model_forward.1} parent=0 // pred_check
    _
  $region7: #{student_model_forward.1} parent=0 // pred_check_branch
    %13 = sbr.rel (0) target = $region9
  $region8: #{student_model_forward.1} parent=0 // pred_region
    _
  $region9: #{student_model_forward.1} parent=0 // pred_fallthru
    _
  // Predicated region
  $region10: #{student_model_forward.1} parent=0 // pred_check
    _
  $region11: #{student_model_forward.1} parent=0 // pred_check_branch
    %15 = sbr.rel (0) target = $region13
  $region12: #{student_model_forward.1} parent=0 // pred_region
    _
  $region13: #{student_model_forward.1} parent=0 // pred_fallthru
    _
  // Predicated region
  $region14: #{student_model_forward.1} parent=0 // pred_check
    _
  $region15: #{student_model_forward.1} parent=0 // pred_check_branch
    %17 = sbr.rel (0) target = $region17
  $region16: #{student_model_forward.1} parent=0 // pred_region
    _
  $region17: #{student_model_forward.1} parent=0 // pred_fallthru
    _
  // Predicated region
  $region18: #{student_model_forward.1} parent=0 // pred_check
    _
  $region19: #{student_model_forward.1} parent=0 // pred_check_branch
    %19 = sbr.rel (0) target = $region21
  $region20: #{student_model_forward.1} parent=0 // pred_region
    _
  $region21: #{student_model_forward.1} parent=0 // pred_fallthru
    _
  %v21 = vld [vmem:[%s0] sm:$0xff]
  %v22 = vld [vmem:[%s0 + $0x8] sm:$0xff]
  %v23 = vld [vmem:[%s0 + $0x10] sm:$0xff]
  %v24 = vld [vmem:[%s0 + $0x18] sm:$0xf]
  %v25 = vld [vmem:[%s0 + $0x1c] sm:$0xff]
  %v26 = vld [vmem:[%s0 + $0x24] sm:$0xff]
  %v27 = vld [vmem:[%s0 + $0x2c] sm:$0xff]
  %v28 = vld [vmem:[%s0 + $0x34] sm:$0xf]
  %v29 = vld [vmem:[%s1] sm:$0xff]
  %v30 = vld [vmem:[%s1 + $0x8] sm:$0xff]
  %v31 = vld [vmem:[%s1 + $0x10] sm:$0xff]
  %v32 = vld [vmem:[%s1 + $0x18] sm:$0xff]
  %v33 = vld [vmem:[%s1 + $0x20] sm:$0xff]
  %v34 = vld [vmem:[%s1 + $0x28] sm:$0xff]
  %v35 = vld [vmem:[%s1 + $0x30] sm:$0xff]
  %v36 = vld [vmem:[%s1 + $0x38] sm:$0xff]
  %v37 = vld [vmem:[%s1 + $0x40] sm:$0xff]
  %v38 = vld [vmem:[%s1 + $0x48] sm:$0xff]
  %v39 = vld [vmem:[%s1 + $0x50] sm:$0xff]
  %v40 = vld [vmem:[%s1 + $0x58] sm:$0xff]
  %v41 = vld [vmem:[%s1 + $0x60] sm:$0xff]
  %v42 = vld [vmem:[%s1 + $0x68] sm:$0xff]
  %v43 = vld [vmem:[%s1 + $0x70] sm:$0xff]
  %v44 = vld [vmem:[%s1 + $0x78] sm:$0xff]
  %v45 = vld [vmem:[%s1 + $0x80] sm:$0xff]
  %v46 = vld [vmem:[%s1 + $0x88] sm:$0xff]
  %v47 = vld [vmem:[%s1 + $0x90] sm:$0xff]
  %v48 = vld [vmem:[%s1 + $0x98] sm:$0xff]
  %v49 = vld [vmem:[%s1 + $0xa0] sm:$0xff]
  %v50 = vld [vmem:[%s1 + $0xa8] sm:$0xff]
  %v51 = vld [vmem:[%s1 + $0xb0] sm:$0xff]
  %v52 = vld [vmem:[%s1 + $0xb8] sm:$0xff]
  %v53 = vld [vmem:[%s1 + $0xc0] sm:$0xff]
  %v54 = vld [vmem:[%s1 + $0xc8] sm:$0xff]
  %v55 = vld [vmem:[%s1 + $0xd0] sm:$0xff]
  %v56 = vld [vmem:[%s1 + $0xd8] sm:$0xff]
  %v57 = vld [vmem:[%s1 + $0xe0] sm:$0xff]
  %v58 = vld [vmem:[%s1 + $0xe8] sm:$0xff]
  %v59 = vld [vmem:[%s1 + $0xf0] sm:$0xff]
  %v60 = vld [vmem:[%s1 + $0xf8] sm:$0xff]
  %v61 = vld [vmem:[%s1 + $0x100] sm:$0xff]
  %v62 = vld [vmem:[%s1 + $0x108] sm:$0xff]
  %v63 = vld [vmem:[%s1 + $0x110] sm:$0xff]
  %v64 = vld [vmem:[%s1 + $0x118] sm:$0xff]
  %v65 = vld [vmem:[%s1 + $0x120] sm:$0xff]
  %v66 = vld [vmem:[%s1 + $0x128] sm:$0xff]
  %v67 = vld [vmem:[%s1 + $0x130] sm:$0xff]
  %v68 = vld [vmem:[%s1 + $0x138] sm:$0xff]
  %v69 = vld [vmem:[%s1 + $0x140] sm:$0xff]
  %v70 = vld [vmem:[%s1 + $0x148] sm:$0xff]
  %v71 = vld [vmem:[%s1 + $0x150] sm:$0xff]
  %v72 = vld [vmem:[%s1 + $0x158] sm:$0xff]
  %v73 = vld [vmem:[%s1 + $0x160] sm:$0xff]
  %v74 = vld [vmem:[%s1 + $0x168] sm:$0xff]
  %v75 = vld [vmem:[%s1 + $0x170] sm:$0xff]
  %v76 = vld [vmem:[%s1 + $0x178] sm:$0xff]
  %v77 = vld [vmem:[%s1 + $0x180] sm:$0xff]
  %v78 = vld [vmem:[%s1 + $0x188] sm:$0xff]
  %v79 = vld [vmem:[%s1 + $0x190] sm:$0xff]
  %v80 = vld [vmem:[%s1 + $0x198] sm:$0xff]
  %v81 = vld [vmem:[%s1 + $0x1a0] sm:$0xff]
  %v82 = vld [vmem:[%s1 + $0x1a8] sm:$0xff]
  %v83 = vld [vmem:[%s1 + $0x1b0] sm:$0xff]
  %v84 = vld [vmem:[%s1 + $0x1b8] sm:$0xff]
  %v85 = vld [vmem:[%s1 + $0x1c0] sm:$0xff]
  %v86 = vld [vmem:[%s1 + $0x1c8] sm:$0xff]
  %v87 = vld [vmem:[%s1 + $0x1d0] sm:$0xff]
  %v88 = vld [vmem:[%s1 + $0x1d8] sm:$0xff]
  %v89 = vld [vmem:[%s1 + $0x1e0] sm:$0xff]
  %v90 = vld [vmem:[%s1 + $0x1e8] sm:$0xff]
  %v91 = vld [vmem:[%s1 + $0x1f0] sm:$0xff]
  %v92 = vld [vmem:[%s1 + $0x1f8] sm:$0xff]
  %v93 = vld [vmem:[%s1 + $0x200] sm:$0xff]
  %v94 = vld [vmem:[%s1 + $0x208] sm:$0xff]
  %v95 = vld [vmem:[%s1 + $0x210] sm:$0xff]
  %v96 = vld [vmem:[%s1 + $0x218] sm:$0xff]
  %v97 = vld [vmem:[%s1 + $0x220] sm:$0xff]
  %v98 = vld [vmem:[%s1 + $0x228] sm:$0xff]
  %v99 = vld [vmem:[%s1 + $0x230] sm:$0xff]
  %v100 = vld [vmem:[%s1 + $0x238] sm:$0xff]
  %v101 = vld [vmem:[%s1 + $0x240] sm:$0xff]
  %v102 = vld [vmem:[%s1 + $0x248] sm:$0xff]
  %v103 = vld [vmem:[%s1 + $0x250] sm:$0xff]
  %v104 = vld [vmem:[%s1 + $0x258] sm:$0xff]
  %v105 = vld [vmem:[%s1 + $0x260] sm:$0xff]
  %v106 = vld [vmem:[%s1 + $0x268] sm:$0xff]
  %v107 = vld [vmem:[%s1 + $0x270] sm:$0xff]
  %v108 = vld [vmem:[%s1 + $0x278] sm:$0xff]
  %v109 = vld [vmem:[%s1 + $0x280] sm:$0xff]
  %v110 = vld [vmem:[%s1 + $0x288] sm:$0xff]
  %v111 = vld [vmem:[%s1 + $0x290] sm:$0xff]
  %v112 = vld [vmem:[%s1 + $0x298] sm:$0xff]
  %v113 = vld [vmem:[%s1 + $0x2a0] sm:$0xff]
  %v114 = vld [vmem:[%s1 + $0x2a8] sm:$0xff]
  %v115 = vld [vmem:[%s1 + $0x2b0] sm:$0xff]
  %v116 = vld [vmem:[%s1 + $0x2b8] sm:$0xff]
  %v117 = vld [vmem:[%s1 + $0x2c0] sm:$0xff]
  %v118 = vld [vmem:[%s1 + $0x2c8] sm:$0xff]
  %v119 = vld [vmem:[%s1 + $0x2d0] sm:$0xff]
  %v120 = vld [vmem:[%s1 + $0x2d8] sm:$0xff]
  %v121 = vld [vmem:[%s1 + $0x2e0] sm:$0xff]
  %v122 = vld [vmem:[%s1 + $0x2e8] sm:$0xff]
  %v123 = vld [vmem:[%s1 + $0x2f0] sm:$0xff]
  %v124 = vld [vmem:[%s1 + $0x2f8] sm:$0xff]
  %v125 = vld [vmem:[%s1 + $0x300] sm:$0xff]
  %v126 = vld [vmem:[%s1 + $0x308] sm:$0xff]
  %v127 = vld [vmem:[%s1 + $0x310] sm:$0xff]
  %v128 = vld [vmem:[%s1 + $0x318] sm:$0xff]
  %v129 = vld [vmem:[%s1 + $0x320] sm:$0xff]
  %v130 = vld [vmem:[%s1 + $0x328] sm:$0xff]
  %v131 = vld [vmem:[%s1 + $0x330] sm:$0xff]
  %v132 = vld [vmem:[%s1 + $0x338] sm:$0xff]
  %v133 = vld [vmem:[%s1 + $0x340] sm:$0xff]
  %v134 = vld [vmem:[%s1 + $0x348] sm:$0xff]
  %v135 = vld [vmem:[%s1 + $0x350] sm:$0xff]
  %v136 = vld [vmem:[%s1 + $0x358] sm:$0xff]
  %v137 = vld [vmem:[%s1 + $0x360] sm:$0xff]
  %v138 = vld [vmem:[%s1 + $0x368] sm:$0xff]
  %v139 = vld [vmem:[%s1 + $0x370] sm:$0xff]
  %v140 = vld [vmem:[%s1 + $0x378] sm:$0xff]
  %v141 = vld [vmem:[%s1 + $0x380] sm:$0xff]
  %v142 = vld [vmem:[%s1 + $0x388] sm:$0xff]
  %v143 = vld [vmem:[%s1 + $0x390] sm:$0xff]
  %v144 = vld [vmem:[%s1 + $0x398] sm:$0xff]
  %v145 = vld [vmem:[%s1 + $0x3a0] sm:$0xff]
  %v146 = vld [vmem:[%s1 + $0x3a8] sm:$0xff]
  %v147 = vld [vmem:[%s1 + $0x3b0] sm:$0xff]
  %v148 = vld [vmem:[%s1 + $0x3b8] sm:$0xff]
  %v149 = vld [vmem:[%s1 + $0x3c0] sm:$0xff]
  %v150 = vld [vmem:[%s1 + $0x3c8] sm:$0xff]
  %v151 = vld [vmem:[%s1 + $0x3d0] sm:$0xff]
  %v152 = vld [vmem:[%s1 + $0x3d8] sm:$0xff]
  %v153 = vld [vmem:[%s1 + $0x3e0] sm:$0xff]
  %v154 = vld [vmem:[%s1 + $0x3e8] sm:$0xff]
  %v155 = vld [vmem:[%s1 + $0x3f0] sm:$0xff]
  %v156 = vld [vmem:[%s1 + $0x3f8] sm:$0xff]
  %v157 = vld [vmem:[%s1 + $0x400] sm:$0xff]
  %v158 = vld [vmem:[%s1 + $0x408] sm:$0xff]
  %v159 = vld [vmem:[%s1 + $0x410] sm:$0xff]
  %v160 = vld [vmem:[%s1 + $0x418] sm:$0xff]
  %v161 = vld [vmem:[%s1 + $0x420] sm:$0xff]
  %v162 = vld [vmem:[%s1 + $0x428] sm:$0xff]
  %v163 = vld [vmem:[%s1 + $0x430] sm:$0xff]
  %v164 = vld [vmem:[%s1 + $0x438] sm:$0xff]
  %v165 = vld [vmem:[%s1 + $0x440] sm:$0xff]
  %v166 = vld [vmem:[%s1 + $0x448] sm:$0xff]
  %v167 = vld [vmem:[%s1 + $0x450] sm:$0xff]
  %v168 = vld [vmem:[%s1 + $0x458] sm:$0xff]
  %v169 = vld [vmem:[%s1 + $0x460] sm:$0xff]
  %v170 = vld [vmem:[%s1 + $0x468] sm:$0xff]
  %v171 = vld [vmem:[%s1 + $0x470] sm:$0xff]
  %v172 = vld [vmem:[%s1 + $0x478] sm:$0xff]
  %v173 = vld [vmem:[%s1 + $0x480] sm:$0xff]
  %v174 = vld [vmem:[%s1 + $0x488] sm:$0xff]
  %v175 = vld [vmem:[%s1 + $0x490] sm:$0xff]
  %v176 = vld [vmem:[%s1 + $0x498] sm:$0xff]
  %v177 = vld [vmem:[%s1 + $0x4a0] sm:$0xff]
  %v178 = vld [vmem:[%s1 + $0x4a8] sm:$0xff]
  %v179 = vld [vmem:[%s1 + $0x4b0] sm:$0xff]
  %v180 = vld [vmem:[%s1 + $0x4b8] sm:$0xff]
  %v181 = vld [vmem:[%s1 + $0x4c0] sm:$0xff]
  %v182 = vld [vmem:[%s1 + $0x4c8] sm:$0xff]
  %v183 = vld [vmem:[%s1 + $0x4d0] sm:$0xff]
  %v184 = vld [vmem:[%s1 + $0x4d8] sm:$0xff]
  %v185 = vld [vmem:[%s1 + $0x4e0] sm:$0xff]
  %v186 = vld [vmem:[%s1 + $0x4e8] sm:$0xff]
  %v187 = vld [vmem:[%s1 + $0x4f0] sm:$0xff]
  %v188 = vld [vmem:[%s1 + $0x4f8] sm:$0xff]
  %v189 = vld [vmem:[%s1 + $0x500] sm:$0xff]
  %v190 = vld [vmem:[%s1 + $0x508] sm:$0xff]
  %v191 = vld [vmem:[%s1 + $0x510] sm:$0xff]
  %v192 = vld [vmem:[%s1 + $0x518] sm:$0xff]
  %v193 = vld [vmem:[%s1 + $0x520] sm:$0xff]
  %v194 = vld [vmem:[%s1 + $0x528] sm:$0xff]
  %v195 = vld [vmem:[%s1 + $0x530] sm:$0xff]
  %v196 = vld [vmem:[%s1 + $0x538] sm:$0xff]
  %v197 = vld [vmem:[%s1 + $0x540] sm:$0xff]
  %v198 = vld [vmem:[%s1 + $0x548] sm:$0xff]
  %v199 = vld [vmem:[%s1 + $0x550] sm:$0xff]
  %v200 = vld [vmem:[%s1 + $0x558] sm:$0xff]
  %v201 = vld [vmem:[%s1 + $0x560] sm:$0xff]
  %v202 = vld [vmem:[%s1 + $0x568] sm:$0xff]
  %v203 = vld [vmem:[%s1 + $0x570] sm:$0xff]
  %v204 = vld [vmem:[%s1 + $0x578] sm:$0xff]
  %v205 = vld [vmem:[%s1 + $0x580] sm:$0xff]
  %v206 = vld [vmem:[%s1 + $0x588] sm:$0xff]
  %v207 = vld [vmem:[%s1 + $0x590] sm:$0xff]
  %v208 = vld [vmem:[%s1 + $0x598] sm:$0xff]
  %v209 = vld [vmem:[%s1 + $0x5a0] sm:$0xff]
  %v210 = vld [vmem:[%s1 + $0x5a8] sm:$0xff]
  %v211 = vld [vmem:[%s1 + $0x5b0] sm:$0xff]
  %v212 = vld [vmem:[%s1 + $0x5b8] sm:$0xff]
  %v213 = vld [vmem:[%s1 + $0x5c0] sm:$0xff]
  %v214 = vld [vmem:[%s1 + $0x5c8] sm:$0xff]
  %v215 = vld [vmem:[%s1 + $0x5d0] sm:$0xff]
  %v216 = vld [vmem:[%s1 + $0x5d8] sm:$0xff]
  %v217 = vld [vmem:[%s1 + $0x5e0] sm:$0xff]
  %v218 = vld [vmem:[%s1 + $0x5e8] sm:$0xff]
  %v219 = vld [vmem:[%s1 + $0x5f0] sm:$0xff]
  %v220 = vld [vmem:[%s1 + $0x5f8] sm:$0xff]
  %v221 = vld [vmem:[%s1 + $0x600] sm:$0xff]
  %v222 = vld [vmem:[%s1 + $0x608] sm:$0xff]
  %v223 = vld [vmem:[%s1 + $0x610] sm:$0xff]
  %v224 = vld [vmem:[%s1 + $0x618] sm:$0xff]
  %v225 = vld [vmem:[%s1 + $0x620] sm:$0xff]
  %v226 = vld [vmem:[%s1 + $0x628] sm:$0xff]
  %v227 = vld [vmem:[%s1 + $0x630] sm:$0xff]
  %v228 = vld [vmem:[%s1 + $0x638] sm:$0xff]
  %v229 = vld [vmem:[%s1 + $0x640] sm:$0xff]
  %v230 = vld [vmem:[%s1 + $0x648] sm:$0xff]
  %v231 = vld [vmem:[%s1 + $0x650] sm:$0xff]
  %v232 = vld [vmem:[%s1 + $0x658] sm:$0xff]
  %v233 = vld [vmem:[%s1 + $0x660] sm:$0xff]
  %v234 = vld [vmem:[%s1 + $0x668] sm:$0xff]
  %v235 = vld [vmem:[%s1 + $0x670] sm:$0xff]
  %v236 = vld [vmem:[%s1 + $0x678] sm:$0xff]
  %v237 = vld [vmem:[%s1 + $0x680] sm:$0xff]
  %v238 = vld [vmem:[%s1 + $0x688] sm:$0xff]
  %v239 = vld [vmem:[%s1 + $0x690] sm:$0xff]
  %v240 = vld [vmem:[%s1 + $0x698] sm:$0xff]
  %v241 = vld [vmem:[%s1 + $0x6a0] sm:$0xff]
  %v242 = vld [vmem:[%s1 + $0x6a8] sm:$0xff]
  %v243 = vld [vmem:[%s1 + $0x6b0] sm:$0xff]
  %v244 = vld [vmem:[%s1 + $0x6b8] sm:$0xff]
  %v245 = vld [vmem:[%s1 + $0x6c0] sm:$0xff]
  %v246 = vld [vmem:[%s1 + $0x6c8] sm:$0xff]
  %v247 = vld [vmem:[%s1 + $0x6d0] sm:$0xff]
  %v248 = vld [vmem:[%s1 + $0x6d8] sm:$0xff]
  %v249 = vld [vmem:[%s1 + $0x6e0] sm:$0xff]
  %v250 = vld [vmem:[%s1 + $0x6e8] sm:$0xff]
  %v251 = vld [vmem:[%s1 + $0x6f0] sm:$0xff]
  %v252 = vld [vmem:[%s1 + $0x6f8] sm:$0xff]
  %v253 = vld [vmem:[%s1 + $0x700] sm:$0xff]
  %v254 = vld [vmem:[%s1 + $0x708] sm:$0xff]
  %v255 = vld [vmem:[%s1 + $0x710] sm:$0xff]
  %v256 = vld [vmem:[%s1 + $0x718] sm:$0xff]
  %v257 = vld [vmem:[%s1 + $0x720] sm:$0xff]
  %v258 = vld [vmem:[%s1 + $0x728] sm:$0xff]
  %v259 = vld [vmem:[%s1 + $0x730] sm:$0xff]
  %v260 = vld [vmem:[%s1 + $0x738] sm:$0xff]
  %v261 = vld [vmem:[%s1 + $0x740] sm:$0xff]
  %v262 = vld [vmem:[%s1 + $0x748] sm:$0xff]
  %v263 = vld [vmem:[%s1 + $0x750] sm:$0xff]
  %v264 = vld [vmem:[%s1 + $0x758] sm:$0xff]
  %v265 = vld [vmem:[%s1 + $0x760] sm:$0xff]
  %v266 = vld [vmem:[%s1 + $0x768] sm:$0xff]
  %v267 = vld [vmem:[%s1 + $0x770] sm:$0xff]
  %v268 = vld [vmem:[%s1 + $0x778] sm:$0xff]
  %v269 = vld [vmem:[%s1 + $0x780] sm:$0xff]
  %v270 = vld [vmem:[%s1 + $0x788] sm:$0xff]
  %v271 = vld [vmem:[%s1 + $0x790] sm:$0xff]
  %v272 = vld [vmem:[%s1 + $0x798] sm:$0xff]
  %v273 = vld [vmem:[%s1 + $0x7a0] sm:$0xff]
  %v274 = vld [vmem:[%s1 + $0x7a8] sm:$0xff]
  %v275 = vld [vmem:[%s1 + $0x7b0] sm:$0xff]
  %v276 = vld [vmem:[%s1 + $0x7b8] sm:$0xff]
  %v277 = vld [vmem:[%s1 + $0x7c0] sm:$0xff]
  %v278 = vld [vmem:[%s1 + $0x7c8] sm:$0xff]
  %v279 = vld [vmem:[%s1 + $0x7d0] sm:$0xff]
  %v280 = vld [vmem:[%s1 + $0x7d8] sm:$0xff]
  %v281 = vld [vmem:[%s1 + $0x7e0] sm:$0xff]
  %v282 = vld [vmem:[%s1 + $0x7e8] sm:$0xff]
  %v283 = vld [vmem:[%s1 + $0x7f0] sm:$0xff]
  %v284 = vld [vmem:[%s1 + $0x7f8] sm:$0xff]
  %v285 = vld [vmem:[%s1 + $0x800] sm:$0xff]
  %v286 = vld [vmem:[%s1 + $0x808] sm:$0xff]
  %v287 = vld [vmem:[%s1 + $0x810] sm:$0xff]
  %v288 = vld [vmem:[%s1 + $0x818] sm:$0xff]
  %v289 = vld [vmem:[%s1 + $0x820] sm:$0xff]
  %v290 = vld [vmem:[%s1 + $0x828] sm:$0xff]
  %v291 = vld [vmem:[%s1 + $0x830] sm:$0xff]
  %v292 = vld [vmem:[%s1 + $0x838] sm:$0xff]
  %v293 = vld [vmem:[%s1 + $0x840] sm:$0xff]
  %v294 = vld [vmem:[%s1 + $0x848] sm:$0xff]
  %v295 = vld [vmem:[%s1 + $0x850] sm:$0xff]
  %v296 = vld [vmem:[%s1 + $0x858] sm:$0xff]
  %v297 = vld [vmem:[%s1 + $0x860] sm:$0xff]
  %v298 = vld [vmem:[%s1 + $0x868] sm:$0xff]
  %v299 = vld [vmem:[%s1 + $0x870] sm:$0xff]
  %v300 = vld [vmem:[%s1 + $0x878] sm:$0xff]
  %v301 = vld [vmem:[%s1 + $0x880] sm:$0xff]
  %v302 = vld [vmem:[%s1 + $0x888] sm:$0xff]
  %v303 = vld [vmem:[%s1 + $0x890] sm:$0xff]
  %v304 = vld [vmem:[%s1 + $0x898] sm:$0xff]
  %v305 = vld [vmem:[%s1 + $0x8a0] sm:$0xff]
  %v306 = vld [vmem:[%s1 + $0x8a8] sm:$0xff]
  %v307 = vld [vmem:[%s1 + $0x8b0] sm:$0xff]
  %v308 = vld [vmem:[%s1 + $0x8b8] sm:$0xff]
  %v309 = vld [vmem:[%s1 + $0x8c0] sm:$0xff]
  %v310 = vld [vmem:[%s1 + $0x8c8] sm:$0xff]
  %v311 = vld [vmem:[%s1 + $0x8d0] sm:$0xff]
  %v312 = vld [vmem:[%s1 + $0x8d8] sm:$0xff]
  %v313 = vld [vmem:[%s1 + $0x8e0] sm:$0xff]
  %v314 = vld [vmem:[%s1 + $0x8e8] sm:$0xff]
  %v315 = vld [vmem:[%s1 + $0x8f0] sm:$0xff]
  %v316 = vld [vmem:[%s1 + $0x8f8] sm:$0xff]
  %v317 = vld [vmem:[%s1 + $0x900] sm:$0xff]
  %v318 = vld [vmem:[%s1 + $0x908] sm:$0xff]
  %v319 = vld [vmem:[%s1 + $0x910] sm:$0xff]
  %v320 = vld [vmem:[%s1 + $0x918] sm:$0xff]
  %v321 = vld [vmem:[%s1 + $0x920] sm:$0xff]
  %v322 = vld [vmem:[%s1 + $0x928] sm:$0xff]
  %v323 = vld [vmem:[%s1 + $0x930] sm:$0xff]
  %v324 = vld [vmem:[%s1 + $0x938] sm:$0xff]
  %v325 = vld [vmem:[%s1 + $0x940] sm:$0xff]
  %v326 = vld [vmem:[%s1 + $0x948] sm:$0xff]
  %v327 = vld [vmem:[%s1 + $0x950] sm:$0xff]
  %v328 = vld [vmem:[%s1 + $0x958] sm:$0xff]
  %v329 = vld [vmem:[%s1 + $0x960] sm:$0xff]
  %v330 = vld [vmem:[%s1 + $0x968] sm:$0xff]
  %v331 = vld [vmem:[%s1 + $0x970] sm:$0xff]
  %v332 = vld [vmem:[%s1 + $0x978] sm:$0xff]
  %v333 = vld [vmem:[%s1 + $0x980] sm:$0xff]
  %v334 = vld [vmem:[%s1 + $0x988] sm:$0xff]
  %v335 = vld [vmem:[%s1 + $0x990] sm:$0xff]
  %v336 = vld [vmem:[%s1 + $0x998] sm:$0xff]
  %v337 = vld [vmem:[%s1 + $0x9a0] sm:$0xff]
  %v338 = vld [vmem:[%s1 + $0x9a8] sm:$0xff]
  %v339 = vld [vmem:[%s1 + $0x9b0] sm:$0xff]
  %v340 = vld [vmem:[%s1 + $0x9b8] sm:$0xff]
  %v341 = vld [vmem:[%s1 + $0x9c0] sm:$0xff]
  %v342 = vld [vmem:[%s1 + $0x9c8] sm:$0xff]
  %v343 = vld [vmem:[%s1 + $0x9d0] sm:$0xff]
  %v344 = vld [vmem:[%s1 + $0x9d8] sm:$0xff]
  %v345 = vld [vmem:[%s1 + $0x9e0] sm:$0xff]
  %v346 = vld [vmem:[%s1 + $0x9e8] sm:$0xff]
  %v347 = vld [vmem:[%s1 + $0x9f0] sm:$0xff]
  %v348 = vld [vmem:[%s1 + $0x9f8] sm:$0xff]
  %v349 = vld [vmem:[%s1 + $0xa00] sm:$0xff]
  %v350 = vld [vmem:[%s1 + $0xa08] sm:$0xff]
  %v351 = vld [vmem:[%s1 + $0xa10] sm:$0xff]
  %v352 = vld [vmem:[%s1 + $0xa18] sm:$0xff]
  %v353 = vld [vmem:[%s1 + $0xa20] sm:$0xff]
  %v354 = vld [vmem:[%s1 + $0xa28] sm:$0xff]
  %v355 = vld [vmem:[%s1 + $0xa30] sm:$0xff]
  %v356 = vld [vmem:[%s1 + $0xa38] sm:$0xff]
  %v357 = vld [vmem:[%s1 + $0xa40] sm:$0xff]
  %v358 = vld [vmem:[%s1 + $0xa48] sm:$0xff]
  %v359 = vld [vmem:[%s1 + $0xa50] sm:$0xff]
  %v360 = vld [vmem:[%s1 + $0xa58] sm:$0xff]
  %v361 = vld [vmem:[%s1 + $0xa60] sm:$0xff]
  %v362 = vld [vmem:[%s1 + $0xa68] sm:$0xff]
  %v363 = vld [vmem:[%s1 + $0xa70] sm:$0xff]
  %v364 = vld [vmem:[%s1 + $0xa78] sm:$0xff]
  %v365 = vld [vmem:[%s1 + $0xa80] sm:$0xff]
  %v366 = vld [vmem:[%s1 + $0xa88] sm:$0xff]
  %v367 = vld [vmem:[%s1 + $0xa90] sm:$0xff]
  %v368 = vld [vmem:[%s1 + $0xa98] sm:$0xff]
  %v369 = vld [vmem:[%s1 + $0xaa0] sm:$0xff]
  %v370 = vld [vmem:[%s1 + $0xaa8] sm:$0xff]
  %v371 = vld [vmem:[%s1 + $0xab0] sm:$0xff]
  %v372 = vld [vmem:[%s1 + $0xab8] sm:$0xff]
  %v373 = vld [vmem:[%s1 + $0xac0] sm:$0xff]
  %v374 = vld [vmem:[%s1 + $0xac8] sm:$0xff]
  %v375 = vld [vmem:[%s1 + $0xad0] sm:$0xff]
  %v376 = vld [vmem:[%s1 + $0xad8] sm:$0xff]
  %v377 = vld [vmem:[%s1 + $0xae0] sm:$0xff]
  %v378 = vld [vmem:[%s1 + $0xae8] sm:$0xff]
  %v379 = vld [vmem:[%s1 + $0xaf0] sm:$0xff]
  %v380 = vld [vmem:[%s1 + $0xaf8] sm:$0xff]
  %v381 = vld [vmem:[%s1 + $0xb00] sm:$0xff]
  %v382 = vld [vmem:[%s1 + $0xb08] sm:$0xff]
  %v383 = vld [vmem:[%s1 + $0xb10] sm:$0xff]
  %v384 = vld [vmem:[%s1 + $0xb18] sm:$0xff]
  %v385 = vld [vmem:[%s1 + $0xb20] sm:$0xff]
  %v386 = vld [vmem:[%s1 + $0xb28] sm:$0xff]
  %v387 = vld [vmem:[%s1 + $0xb30] sm:$0xff]
  %v388 = vld [vmem:[%s1 + $0xb38] sm:$0xff]
  %v389 = vld [vmem:[%s1 + $0xb40] sm:$0xff]
  %v390 = vld [vmem:[%s1 + $0xb48] sm:$0xff]
  %v391 = vld [vmem:[%s1 + $0xb50] sm:$0xff]
  %v392 = vld [vmem:[%s1 + $0xb58] sm:$0xff]
  %v393 = vld [vmem:[%s1 + $0xb60] sm:$0xff]
  %v394 = vld [vmem:[%s1 + $0xb68] sm:$0xff]
  %v395 = vld [vmem:[%s1 + $0xb70] sm:$0xff]
  %v396 = vld [vmem:[%s1 + $0xb78] sm:$0xff]
  %v397 = vld [vmem:[%s1 + $0xb80] sm:$0xff]
  %v398 = vld [vmem:[%s1 + $0xb88] sm:$0xff]
  %v399 = vld [vmem:[%s1 + $0xb90] sm:$0xff]
  %v400 = vld [vmem:[%s1 + $0xb98] sm:$0xff]
  %v401 = vld [vmem:[%s1 + $0xba0] sm:$0xff]
  %v402 = vld [vmem:[%s1 + $0xba8] sm:$0xff]
  %v403 = vld [vmem:[%s1 + $0xbb0] sm:$0xff]
  %v404 = vld [vmem:[%s1 + $0xbb8] sm:$0xff]
  %v405 = vld [vmem:[%s1 + $0xbc0] sm:$0xff]
  %v406 = vld [vmem:[%s1 + $0xbc8] sm:$0xff]
  %v407 = vld [vmem:[%s1 + $0xbd0] sm:$0xff]
  %v408 = vld [vmem:[%s1 + $0xbd8] sm:$0xff]
  %v409 = vld [vmem:[%s1 + $0xbe0] sm:$0xff]
  %v410 = vld [vmem:[%s1 + $0xbe8] sm:$0xff]
  %v411 = vld [vmem:[%s1 + $0xbf0] sm:$0xff]
  %v412 = vld [vmem:[%s1 + $0xbf8] sm:$0xff]
  %v413 = vld [vmem:[%s1 + $0xc00] sm:$0xff]
  %v414 = vld [vmem:[%s1 + $0xc08] sm:$0xff]
  %v415 = vld [vmem:[%s1 + $0xc10] sm:$0xff]
  %v416 = vld [vmem:[%s1 + $0xc18] sm:$0xff]
  %v417 = vld [vmem:[%s1 + $0xc20] sm:$0xff]
  %v418 = vld [vmem:[%s1 + $0xc28] sm:$0xff]
  %v419 = vld [vmem:[%s1 + $0xc30] sm:$0xff]
  %v420 = vld [vmem:[%s1 + $0xc38] sm:$0xff]
  %v421 = vld [vmem:[%s2] sm:$0xff]
  %v423 = vlaneseq
  %v424 = vshrl.u32 %v423, 7
  %v425 = vsub.s32 0, %v424
  %v426 = vrot.slane %v421, %v425
  %v427 = vlaneseq
  %v428 = vshrl.u32 %v427, 7
  %v429 = vsub.s32 1, %v428
  %v430 = vrot.slane %v421, %v429
  %v431 = vlaneseq
  %v432 = vshrl.u32 %v431, 7
  %v433 = vsub.s32 2, %v432
  %v434 = vrot.slane %v421, %v433
  %v435 = vlaneseq
  %v436 = vshrl.u32 %v435, 7
  %v437 = vsub.s32 3, %v436
  %v438 = vrot.slane %v421, %v437
  %v439 = vlaneseq
  %v440 = vshrl.u32 %v439, 7
  %v441 = vsub.s32 4, %v440
  %v442 = vrot.slane %v421, %v441
  %v443 = vlaneseq
  %v444 = vshrl.u32 %v443, 7
  %v445 = vsub.s32 5, %v444
  %v446 = vrot.slane %v421, %v445
  %v447 = vlaneseq
  %v448 = vshrl.u32 %v447, 7
  %v449 = vsub.s32 6, %v448
  %v450 = vrot.slane %v421, %v449
  %v451 = vlaneseq
  %v452 = vshrl.u32 %v451, 7
  %v453 = vsub.s32 7, %v452
  %v454 = vrot.slane %v421, %v453
  %v471 = vunpack.c.l.b16 %v21
  %v472 = vunpack.c.h.b16 %v21
  %v473 = vunpack.c.l.b16 %v22
  %v474 = vunpack.c.h.b16 %v22
  %v475 = vunpack.c.l.b16 %v23
  %v476 = vunpack.c.h.b16 %v23
  %v477 = vunpack.c.l.b16 %v24
  %v478 = vunpack.c.l.b16 %v25
  %v479 = vunpack.c.h.b16 %v25
  %v480 = vunpack.c.l.b16 %v26
  %v481 = vunpack.c.h.b16 %v26
  %v482 = vunpack.c.l.b16 %v27
  %v483 = vunpack.c.h.b16 %v27
  %v484 = vunpack.c.l.b16 %v28
  %v485 = vpack.c.b16 %v478, %v471
  %v486 = vpack.c.b16 %v479, %v472
  %v487 = vpack.c.b16 %v480, %v473
  %v488 = vpack.c.b16 %v481, %v474
  %v489 = vpack.c.b16 %v482, %v475
  %v490 = vpack.c.b16 %v483, %v476
  %v491 = vpack.c.b16 %v484, %v477
  %v890 = vunpack.c.l.b16 %v29
  %v891 = vunpack.c.h.b16 %v29
  %v892 = vunpack.c.l.b16 %v30
  %v893 = vunpack.c.h.b16 %v30
  %v894 = vunpack.c.l.b16 %v31
  %v895 = vunpack.c.h.b16 %v31
  %v896 = vunpack.c.l.b16 %v32
  %v897 = vunpack.c.h.b16 %v32
  %v898 = vunpack.c.l.b16 %v33
  %v899 = vunpack.c.h.b16 %v33
  %v900 = vunpack.c.l.b16 %v34
  %v901 = vunpack.c.h.b16 %v34
  %v902 = vunpack.c.l.b16 %v35
  %v903 = vunpack.c.h.b16 %v35
  %v904 = vunpack.c.l.b16 %v36
  %v905 = vunpack.c.h.b16 %v36
  %v906 = vunpack.c.l.b16 %v37
  %v907 = vunpack.c.h.b16 %v37
  %v908 = vunpack.c.l.b16 %v38
  %v909 = vunpack.c.h.b16 %v38
  %v910 = vunpack.c.l.b16 %v39
  %v911 = vunpack.c.h.b16 %v39
  %v912 = vunpack.c.l.b16 %v40
  %v913 = vunpack.c.h.b16 %v40
  %v914 = vunpack.c.l.b16 %v41
  %v915 = vunpack.c.h.b16 %v41
  %v916 = vunpack.c.l.b16 %v42
  %v917 = vunpack.c.h.b16 %v42
  %v918 = vunpack.c.l.b16 %v43
  %v919 = vunpack.c.h.b16 %v43
  %v920 = vunpack.c.l.b16 %v44
  %v921 = vunpack.c.h.b16 %v44
  %v922 = vunpack.c.l.b16 %v45
  %v923 = vunpack.c.h.b16 %v45
  %v924 = vunpack.c.l.b16 %v46
  %v925 = vunpack.c.h.b16 %v46
  %v926 = vunpack.c.l.b16 %v47
  %v927 = vunpack.c.h.b16 %v47
  %v928 = vunpack.c.l.b16 %v48
  %v929 = vunpack.c.h.b16 %v48
  %v930 = vunpack.c.l.b16 %v49
  %v931 = vunpack.c.h.b16 %v49
  %v932 = vunpack.c.l.b16 %v50
  %v933 = vunpack.c.h.b16 %v50
  %v934 = vunpack.c.l.b16 %v51
  %v935 = vunpack.c.h.b16 %v51
  %v936 = vunpack.c.l.b16 %v52
  %v937 = vunpack.c.h.b16 %v52
  %v938 = vunpack.c.l.b16 %v53
  %v939 = vunpack.c.h.b16 %v53
  %v940 = vunpack.c.l.b16 %v54
  %v941 = vunpack.c.h.b16 %v54
  %v942 = vunpack.c.l.b16 %v55
  %v943 = vunpack.c.h.b16 %v55
  %v944 = vunpack.c.l.b16 %v56
  %v945 = vunpack.c.h.b16 %v56
  %v946 = vunpack.c.l.b16 %v57
  %v947 = vunpack.c.h.b16 %v57
  %v948 = vunpack.c.l.b16 %v58
  %v949 = vunpack.c.h.b16 %v58
  %v950 = vunpack.c.l.b16 %v59
  %v951 = vunpack.c.h.b16 %v59
  %v952 = vunpack.c.l.b16 %v60
  %v953 = vunpack.c.h.b16 %v60
  %v954 = vunpack.c.l.b16 %v61
  %v955 = vunpack.c.h.b16 %v61
  %v956 = vunpack.c.l.b16 %v62
  %v957 = vunpack.c.h.b16 %v62
  %v958 = vunpack.c.l.b16 %v63
  %v959 = vunpack.c.h.b16 %v63
  %v960 = vunpack.c.l.b16 %v64
  %v961 = vunpack.c.h.b16 %v64
  %v962 = vunpack.c.l.b16 %v65
  %v963 = vunpack.c.h.b16 %v65
  %v964 = vunpack.c.l.b16 %v66
  %v965 = vunpack.c.h.b16 %v66
  %v966 = vunpack.c.l.b16 %v67
  %v967 = vunpack.c.h.b16 %v67
  %v968 = vunpack.c.l.b16 %v68
  %v969 = vunpack.c.h.b16 %v68
  %v970 = vunpack.c.l.b16 %v69
  %v971 = vunpack.c.h.b16 %v69
  %v972 = vunpack.c.l.b16 %v70
  %v973 = vunpack.c.h.b16 %v70
  %v974 = vunpack.c.l.b16 %v71
  %v975 = vunpack.c.h.b16 %v71
  %v976 = vunpack.c.l.b16 %v72
  %v977 = vunpack.c.h.b16 %v72
  %v978 = vunpack.c.l.b16 %v73
  %v979 = vunpack.c.h.b16 %v73
  %v980 = vunpack.c.l.b16 %v74
  %v981 = vunpack.c.h.b16 %v74
  %v982 = vunpack.c.l.b16 %v75
  %v983 = vunpack.c.h.b16 %v75
  %v984 = vunpack.c.l.b16 %v76
  %v985 = vunpack.c.h.b16 %v76
  %v986 = vunpack.c.l.b16 %v77
  %v987 = vunpack.c.h.b16 %v77
  %v988 = vunpack.c.l.b16 %v78
  %v989 = vunpack.c.h.b16 %v78
  %v990 = vunpack.c.l.b16 %v79
  %v991 = vunpack.c.h.b16 %v79
  %v992 = vunpack.c.l.b16 %v80
  %v993 = vunpack.c.h.b16 %v80
  %v994 = vunpack.c.l.b16 %v81
  %v995 = vunpack.c.h.b16 %v81
  %v996 = vunpack.c.l.b16 %v82
  %v997 = vunpack.c.h.b16 %v82
  %v998 = vunpack.c.l.b16 %v83
  %v999 = vunpack.c.h.b16 %v83
  %v1000 = vunpack.c.l.b16 %v84
  %v1001 = vunpack.c.h.b16 %v84
  %v1002 = vunpack.c.l.b16 %v85
  %v1003 = vunpack.c.h.b16 %v85
  %v1004 = vunpack.c.l.b16 %v86
  %v1005 = vunpack.c.h.b16 %v86
  %v1006 = vunpack.c.l.b16 %v87
  %v1007 = vunpack.c.h.b16 %v87
  %v1008 = vunpack.c.l.b16 %v88
  %v1009 = vunpack.c.h.b16 %v88
  %v1010 = vunpack.c.l.b16 %v89
  %v1011 = vunpack.c.h.b16 %v89
  %v1012 = vunpack.c.l.b16 %v90
  %v1013 = vunpack.c.h.b16 %v90
  %v1014 = vunpack.c.l.b16 %v91
  %v1015 = vunpack.c.h.b16 %v91
  %v1016 = vunpack.c.l.b16 %v92
  %v1017 = vunpack.c.h.b16 %v92
  %v1018 = vunpack.c.l.b16 %v93
  %v1019 = vunpack.c.h.b16 %v93
  %v1020 = vunpack.c.l.b16 %v94
  %v1021 = vunpack.c.h.b16 %v94
  %v1022 = vunpack.c.l.b16 %v95
  %v1023 = vunpack.c.h.b16 %v95
  %v1024 = vunpack.c.l.b16 %v96
  %v1025 = vunpack.c.h.b16 %v96
  %v1026 = vunpack.c.l.b16 %v97
  %v1027 = vunpack.c.h.b16 %v97
  %v1028 = vunpack.c.l.b16 %v98
  %v1029 = vunpack.c.h.b16 %v98
  %v1030 = vunpack.c.l.b16 %v99
  %v1031 = vunpack.c.h.b16 %v99
  %v1032 = vunpack.c.l.b16 %v100
  %v1033 = vunpack.c.h.b16 %v100
  %v1034 = vunpack.c.l.b16 %v101
  %v1035 = vunpack.c.h.b16 %v101
  %v1036 = vunpack.c.l.b16 %v102
  %v1037 = vunpack.c.h.b16 %v102
  %v1038 = vunpack.c.l.b16 %v103
  %v1039 = vunpack.c.h.b16 %v103
  %v1040 = vunpack.c.l.b16 %v104
  %v1041 = vunpack.c.h.b16 %v104
  %v1042 = vunpack.c.l.b16 %v105
  %v1043 = vunpack.c.h.b16 %v105
  %v1044 = vunpack.c.l.b16 %v106
  %v1045 = vunpack.c.h.b16 %v106
  %v1046 = vunpack.c.l.b16 %v107
  %v1047 = vunpack.c.h.b16 %v107
  %v1048 = vunpack.c.l.b16 %v108
  %v1049 = vunpack.c.h.b16 %v108
  %v1050 = vunpack.c.l.b16 %v109
  %v1051 = vunpack.c.h.b16 %v109
  %v1052 = vunpack.c.l.b16 %v110
  %v1053 = vunpack.c.h.b16 %v110
  %v1054 = vunpack.c.l.b16 %v111
  %v1055 = vunpack.c.h.b16 %v111
  %v1056 = vunpack.c.l.b16 %v112
  %v1057 = vunpack.c.h.b16 %v112
  %v1058 = vunpack.c.l.b16 %v113
  %v1059 = vunpack.c.h.b16 %v113
  %v1060 = vunpack.c.l.b16 %v114
  %v1061 = vunpack.c.h.b16 %v114
  %v1062 = vunpack.c.l.b16 %v115
  %v1063 = vunpack.c.h.b16 %v115
  %v1064 = vunpack.c.l.b16 %v116
  %v1065 = vunpack.c.h.b16 %v116
  %v1066 = vunpack.c.l.b16 %v117
  %v1067 = vunpack.c.h.b16 %v117
  %v1068 = vunpack.c.l.b16 %v118
  %v1069 = vunpack.c.h.b16 %v118
  %v1070 = vunpack.c.l.b16 %v119
  %v1071 = vunpack.c.h.b16 %v119
  %v1072 = vunpack.c.l.b16 %v120
  %v1073 = vunpack.c.h.b16 %v120
  %v1074 = vunpack.c.l.b16 %v121
  %v1075 = vunpack.c.h.b16 %v121
  %v1076 = vunpack.c.l.b16 %v122
  %v1077 = vunpack.c.h.b16 %v122
  %v1078 = vunpack.c.l.b16 %v123
  %v1079 = vunpack.c.h.b16 %v123
  %v1080 = vunpack.c.l.b16 %v124
  %v1081 = vunpack.c.h.b16 %v124
  %v1082 = vunpack.c.l.b16 %v125
  %v1083 = vunpack.c.h.b16 %v125
  %v1084 = vunpack.c.l.b16 %v126
  %v1085 = vunpack.c.h.b16 %v126
  %v1086 = vunpack.c.l.b16 %v127
  %v1087 = vunpack.c.h.b16 %v127
  %v1088 = vunpack.c.l.b16 %v128
  %v1089 = vunpack.c.h.b16 %v128
  %v1090 = vunpack.c.l.b16 %v129
  %v1091 = vunpack.c.h.b16 %v129
  %v1092 = vunpack.c.l.b16 %v130
  %v1093 = vunpack.c.h.b16 %v130
  %v1094 = vunpack.c.l.b16 %v131
  %v1095 = vunpack.c.h.b16 %v131
  %v1096 = vunpack.c.l.b16 %v132
  %v1097 = vunpack.c.h.b16 %v132
  %v1098 = vunpack.c.l.b16 %v133
  %v1099 = vunpack.c.h.b16 %v133
  %v1100 = vunpack.c.l.b16 %v134
  %v1101 = vunpack.c.h.b16 %v134
  %v1102 = vunpack.c.l.b16 %v135
  %v1103 = vunpack.c.h.b16 %v135
  %v1104 = vunpack.c.l.b16 %v136
  %v1105 = vunpack.c.h.b16 %v136
  %v1106 = vunpack.c.l.b16 %v137
  %v1107 = vunpack.c.h.b16 %v137
  %v1108 = vunpack.c.l.b16 %v138
  %v1109 = vunpack.c.h.b16 %v138
  %v1110 = vunpack.c.l.b16 %v139
  %v1111 = vunpack.c.h.b16 %v139
  %v1112 = vunpack.c.l.b16 %v140
  %v1113 = vunpack.c.h.b16 %v140
  %v1114 = vunpack.c.l.b16 %v141
  %v1115 = vunpack.c.h.b16 %v141
  %v1116 = vunpack.c.l.b16 %v142
  %v1117 = vunpack.c.h.b16 %v142
  %v1118 = vunpack.c.l.b16 %v143
  %v1119 = vunpack.c.h.b16 %v143
  %v1120 = vunpack.c.l.b16 %v144
  %v1121 = vunpack.c.h.b16 %v144
  %v1122 = vunpack.c.l.b16 %v145
  %v1123 = vunpack.c.h.b16 %v145
  %v1124 = vunpack.c.l.b16 %v146
  %v1125 = vunpack.c.h.b16 %v146
  %v1126 = vunpack.c.l.b16 %v147
  %v1127 = vunpack.c.h.b16 %v147
  %v1128 = vunpack.c.l.b16 %v148
  %v1129 = vunpack.c.h.b16 %v148
  %v1130 = vunpack.c.l.b16 %v149
  %v1131 = vunpack.c.h.b16 %v149
  %v1132 = vunpack.c.l.b16 %v150
  %v1133 = vunpack.c.h.b16 %v150
  %v1134 = vunpack.c.l.b16 %v151
  %v1135 = vunpack.c.h.b16 %v151
  %v1136 = vunpack.c.l.b16 %v152
  %v1137 = vunpack.c.h.b16 %v152
  %v1138 = vunpack.c.l.b16 %v153
  %v1139 = vunpack.c.h.b16 %v153
  %v1140 = vunpack.c.l.b16 %v154
  %v1141 = vunpack.c.h.b16 %v154
  %v1142 = vunpack.c.l.b16 %v155
  %v1143 = vunpack.c.h.b16 %v155
  %v1144 = vunpack.c.l.b16 %v156
  %v1145 = vunpack.c.h.b16 %v156
  %v1146 = vunpack.c.l.b16 %v157
  %v1147 = vunpack.c.h.b16 %v157
  %v1148 = vunpack.c.l.b16 %v158
  %v1149 = vunpack.c.h.b16 %v158
  %v1150 = vunpack.c.l.b16 %v159
  %v1151 = vunpack.c.h.b16 %v159
  %v1152 = vunpack.c.l.b16 %v160
  %v1153 = vunpack.c.h.b16 %v160
  %v1154 = vunpack.c.l.b16 %v161
  %v1155 = vunpack.c.h.b16 %v161
  %v1156 = vunpack.c.l.b16 %v162
  %v1157 = vunpack.c.h.b16 %v162
  %v1158 = vunpack.c.l.b16 %v163
  %v1159 = vunpack.c.h.b16 %v163
  %v1160 = vunpack.c.l.b16 %v164
  %v1161 = vunpack.c.h.b16 %v164
  %v1162 = vunpack.c.l.b16 %v165
  %v1163 = vunpack.c.h.b16 %v165
  %v1164 = vunpack.c.l.b16 %v166
  %v1165 = vunpack.c.h.b16 %v166
  %v1166 = vunpack.c.l.b16 %v167
  %v1167 = vunpack.c.h.b16 %v167
  %v1168 = vunpack.c.l.b16 %v168
  %v1169 = vunpack.c.h.b16 %v168
  %v1170 = vunpack.c.l.b16 %v169
  %v1171 = vunpack.c.h.b16 %v169
  %v1172 = vunpack.c.l.b16 %v170
  %v1173 = vunpack.c.h.b16 %v170
  %v1174 = vunpack.c.l.b16 %v171
  %v1175 = vunpack.c.h.b16 %v171
  %v1176 = vunpack.c.l.b16 %v172
  %v1177 = vunpack.c.h.b16 %v172
  %v1178 = vunpack.c.l.b16 %v173
  %v1179 = vunpack.c.h.b16 %v173
  %v1180 = vunpack.c.l.b16 %v174
  %v1181 = vunpack.c.h.b16 %v174
  %v1182 = vunpack.c.l.b16 %v175
  %v1183 = vunpack.c.h.b16 %v175
  %v1184 = vunpack.c.l.b16 %v176
  %v1185 = vunpack.c.h.b16 %v176
  %v1186 = vunpack.c.l.b16 %v177
  %v1187 = vunpack.c.h.b16 %v177
  %v1188 = vunpack.c.l.b16 %v178
  %v1189 = vunpack.c.h.b16 %v178
  %v1190 = vunpack.c.l.b16 %v179
  %v1191 = vunpack.c.h.b16 %v179
  %v1192 = vunpack.c.l.b16 %v180
  %v1193 = vunpack.c.h.b16 %v180
  %v1194 = vunpack.c.l.b16 %v181
  %v1195 = vunpack.c.h.b16 %v181
  %v1196 = vunpack.c.l.b16 %v182
  %v1197 = vunpack.c.h.b16 %v182
  %v1198 = vunpack.c.l.b16 %v183
  %v1199 = vunpack.c.h.b16 %v183
  %v1200 = vunpack.c.l.b16 %v184
  %v1201 = vunpack.c.h.b16 %v184
  %v1202 = vunpack.c.l.b16 %v185
  %v1203 = vunpack.c.h.b16 %v185
  %v1204 = vunpack.c.l.b16 %v186
  %v1205 = vunpack.c.h.b16 %v186
  %v1206 = vunpack.c.l.b16 %v187
  %v1207 = vunpack.c.h.b16 %v187
  %v1208 = vunpack.c.l.b16 %v188
  %v1209 = vunpack.c.h.b16 %v188
  %v1210 = vunpack.c.l.b16 %v189
  %v1211 = vunpack.c.h.b16 %v189
  %v1212 = vunpack.c.l.b16 %v190
  %v1213 = vunpack.c.h.b16 %v190
  %v1214 = vunpack.c.l.b16 %v191
  %v1215 = vunpack.c.h.b16 %v191
  %v1216 = vunpack.c.l.b16 %v192
  %v1217 = vunpack.c.h.b16 %v192
  %v1218 = vunpack.c.l.b16 %v193
  %v1219 = vunpack.c.h.b16 %v193
  %v1220 = vunpack.c.l.b16 %v194
  %v1221 = vunpack.c.h.b16 %v194
  %v1222 = vunpack.c.l.b16 %v195
  %v1223 = vunpack.c.h.b16 %v195
  %v1224 = vunpack.c.l.b16 %v196
  %v1225 = vunpack.c.h.b16 %v196
  %v1226 = vunpack.c.l.b16 %v197
  %v1227 = vunpack.c.h.b16 %v197
  %v1228 = vunpack.c.l.b16 %v198
  %v1229 = vunpack.c.h.b16 %v198
  %v1230 = vunpack.c.l.b16 %v199
  %v1231 = vunpack.c.h.b16 %v199
  %v1232 = vunpack.c.l.b16 %v200
  %v1233 = vunpack.c.h.b16 %v200
  %v1234 = vunpack.c.l.b16 %v201
  %v1235 = vunpack.c.h.b16 %v201
  %v1236 = vunpack.c.l.b16 %v202
  %v1237 = vunpack.c.h.b16 %v202
  %v1238 = vunpack.c.l.b16 %v203
  %v1239 = vunpack.c.h.b16 %v203
  %v1240 = vunpack.c.l.b16 %v204
  %v1241 = vunpack.c.h.b16 %v204
  %v1242 = vunpack.c.l.b16 %v205
  %v1243 = vunpack.c.h.b16 %v205
  %v1244 = vunpack.c.l.b16 %v206
  %v1245 = vunpack.c.h.b16 %v206
  %v1246 = vunpack.c.l.b16 %v207
  %v1247 = vunpack.c.h.b16 %v207
  %v1248 = vunpack.c.l.b16 %v208
  %v1249 = vunpack.c.h.b16 %v208
  %v1250 = vunpack.c.l.b16 %v209
  %v1251 = vunpack.c.h.b16 %v209
  %v1252 = vunpack.c.l.b16 %v210
  %v1253 = vunpack.c.h.b16 %v210
  %v1254 = vunpack.c.l.b16 %v211
  %v1255 = vunpack.c.h.b16 %v211
  %v1256 = vunpack.c.l.b16 %v212
  %v1257 = vunpack.c.h.b16 %v212
  %v1258 = vunpack.c.l.b16 %v213
  %v1259 = vunpack.c.h.b16 %v213
  %v1260 = vunpack.c.l.b16 %v214
  %v1261 = vunpack.c.h.b16 %v214
  %v1262 = vunpack.c.l.b16 %v215
  %v1263 = vunpack.c.h.b16 %v215
  %v1264 = vunpack.c.l.b16 %v216
  %v1265 = vunpack.c.h.b16 %v216
  %v1266 = vunpack.c.l.b16 %v217
  %v1267 = vunpack.c.h.b16 %v217
  %v1268 = vunpack.c.l.b16 %v218
  %v1269 = vunpack.c.h.b16 %v218
  %v1270 = vunpack.c.l.b16 %v219
  %v1271 = vunpack.c.h.b16 %v219
  %v1272 = vunpack.c.l.b16 %v220
  %v1273 = vunpack.c.h.b16 %v220
  %v1274 = vunpack.c.l.b16 %v221
  %v1275 = vunpack.c.h.b16 %v221
  %v1276 = vunpack.c.l.b16 %v222
  %v1277 = vunpack.c.h.b16 %v222
  %v1278 = vunpack.c.l.b16 %v223
  %v1279 = vunpack.c.h.b16 %v223
  %v1280 = vunpack.c.l.b16 %v224
  %v1281 = vunpack.c.h.b16 %v224
  %v1282 = vunpack.c.l.b16 %v225
  %v1283 = vunpack.c.h.b16 %v225
  %v1284 = vunpack.c.l.b16 %v226
  %v1285 = vunpack.c.h.b16 %v226
  %v1286 = vunpack.c.l.b16 %v227
  %v1287 = vunpack.c.h.b16 %v227
  %v1288 = vunpack.c.l.b16 %v228
  %v1289 = vunpack.c.h.b16 %v228
  %v1290 = vunpack.c.l.b16 %v229
  %v1291 = vunpack.c.h.b16 %v229
  %v1292 = vunpack.c.l.b16 %v230
  %v1293 = vunpack.c.h.b16 %v230
  %v1294 = vunpack.c.l.b16 %v231
  %v1295 = vunpack.c.h.b16 %v231
  %v1296 = vunpack.c.l.b16 %v232
  %v1297 = vunpack.c.h.b16 %v232
  %v1298 = vunpack.c.l.b16 %v233
  %v1299 = vunpack.c.h.b16 %v233
  %v1300 = vunpack.c.l.b16 %v234
  %v1301 = vunpack.c.h.b16 %v234
  %v1302 = vunpack.c.l.b16 %v235
  %v1303 = vunpack.c.h.b16 %v235
  %v1304 = vunpack.c.l.b16 %v236
  %v1305 = vunpack.c.h.b16 %v236
  %v1306 = vunpack.c.l.b16 %v237
  %v1307 = vunpack.c.h.b16 %v237
  %v1308 = vunpack.c.l.b16 %v238
  %v1309 = vunpack.c.h.b16 %v238
  %v1310 = vunpack.c.l.b16 %v239
  %v1311 = vunpack.c.h.b16 %v239
  %v1312 = vunpack.c.l.b16 %v240
  %v1313 = vunpack.c.h.b16 %v240
  %v1314 = vunpack.c.l.b16 %v241
  %v1315 = vunpack.c.h.b16 %v241
  %v1316 = vunpack.c.l.b16 %v242
  %v1317 = vunpack.c.h.b16 %v242
  %v1318 = vunpack.c.l.b16 %v243
  %v1319 = vunpack.c.h.b16 %v243
  %v1320 = vunpack.c.l.b16 %v244
  %v1321 = vunpack.c.h.b16 %v244
  %v1322 = vunpack.c.l.b16 %v245
  %v1323 = vunpack.c.h.b16 %v245
  %v1324 = vunpack.c.l.b16 %v246
  %v1325 = vunpack.c.h.b16 %v246
  %v1326 = vunpack.c.l.b16 %v247
  %v1327 = vunpack.c.h.b16 %v247
  %v1328 = vunpack.c.l.b16 %v248
  %v1329 = vunpack.c.h.b16 %v248
  %v1330 = vunpack.c.l.b16 %v249
  %v1331 = vunpack.c.h.b16 %v249
  %v1332 = vunpack.c.l.b16 %v250
  %v1333 = vunpack.c.h.b16 %v250
  %v1334 = vunpack.c.l.b16 %v251
  %v1335 = vunpack.c.h.b16 %v251
  %v1336 = vunpack.c.l.b16 %v252
  %v1337 = vunpack.c.h.b16 %v252
  %v1338 = vunpack.c.l.b16 %v253
  %v1339 = vunpack.c.h.b16 %v253
  %v1340 = vunpack.c.l.b16 %v254
  %v1341 = vunpack.c.h.b16 %v254
  %v1342 = vunpack.c.l.b16 %v255
  %v1343 = vunpack.c.h.b16 %v255
  %v1344 = vunpack.c.l.b16 %v256
  %v1345 = vunpack.c.h.b16 %v256
  %v1346 = vunpack.c.l.b16 %v257
  %v1347 = vunpack.c.h.b16 %v257
  %v1348 = vunpack.c.l.b16 %v258
  %v1349 = vunpack.c.h.b16 %v258
  %v1350 = vunpack.c.l.b16 %v259
  %v1351 = vunpack.c.h.b16 %v259
  %v1352 = vunpack.c.l.b16 %v260
  %v1353 = vunpack.c.h.b16 %v260
  %v1354 = vunpack.c.l.b16 %v261
  %v1355 = vunpack.c.h.b16 %v261
  %v1356 = vunpack.c.l.b16 %v262
  %v1357 = vunpack.c.h.b16 %v262
  %v1358 = vunpack.c.l.b16 %v263
  %v1359 = vunpack.c.h.b16 %v263
  %v1360 = vunpack.c.l.b16 %v264
  %v1361 = vunpack.c.h.b16 %v264
  %v1362 = vunpack.c.l.b16 %v265
  %v1363 = vunpack.c.h.b16 %v265
  %v1364 = vunpack.c.l.b16 %v266
  %v1365 = vunpack.c.h.b16 %v266
  %v1366 = vunpack.c.l.b16 %v267
  %v1367 = vunpack.c.h.b16 %v267
  %v1368 = vunpack.c.l.b16 %v268
  %v1369 = vunpack.c.h.b16 %v268
  %v1370 = vunpack.c.l.b16 %v269
  %v1371 = vunpack.c.h.b16 %v269
  %v1372 = vunpack.c.l.b16 %v270
  %v1373 = vunpack.c.h.b16 %v270
  %v1374 = vunpack.c.l.b16 %v271
  %v1375 = vunpack.c.h.b16 %v271
  %v1376 = vunpack.c.l.b16 %v272
  %v1377 = vunpack.c.h.b16 %v272
  %v1378 = vunpack.c.l.b16 %v273
  %v1379 = vunpack.c.h.b16 %v273
  %v1380 = vunpack.c.l.b16 %v274
  %v1381 = vunpack.c.h.b16 %v274
  %v1382 = vunpack.c.l.b16 %v275
  %v1383 = vunpack.c.h.b16 %v275
  %v1384 = vunpack.c.l.b16 %v276
  %v1385 = vunpack.c.h.b16 %v276
  %v1386 = vunpack.c.l.b16 %v277
  %v1387 = vunpack.c.h.b16 %v277
  %v1388 = vunpack.c.l.b16 %v278
  %v1389 = vunpack.c.h.b16 %v278
  %v1390 = vunpack.c.l.b16 %v279
  %v1391 = vunpack.c.h.b16 %v279
  %v1392 = vunpack.c.l.b16 %v280
  %v1393 = vunpack.c.h.b16 %v280
  %v1394 = vunpack.c.l.b16 %v281
  %v1395 = vunpack.c.h.b16 %v281
  %v1396 = vunpack.c.l.b16 %v282
  %v1397 = vunpack.c.h.b16 %v282
  %v1398 = vunpack.c.l.b16 %v283
  %v1399 = vunpack.c.h.b16 %v283
  %v1400 = vunpack.c.l.b16 %v284
  %v1401 = vunpack.c.h.b16 %v284
  %v1402 = vunpack.c.l.b16 %v285
  %v1403 = vunpack.c.h.b16 %v285
  %v1404 = vunpack.c.l.b16 %v286
  %v1405 = vunpack.c.h.b16 %v286
  %v1406 = vunpack.c.l.b16 %v287
  %v1407 = vunpack.c.h.b16 %v287
  %v1408 = vunpack.c.l.b16 %v288
  %v1409 = vunpack.c.h.b16 %v288
  %v1410 = vunpack.c.l.b16 %v289
  %v1411 = vunpack.c.h.b16 %v289
  %v1412 = vunpack.c.l.b16 %v290
  %v1413 = vunpack.c.h.b16 %v290
  %v1414 = vunpack.c.l.b16 %v291
  %v1415 = vunpack.c.h.b16 %v291
  %v1416 = vunpack.c.l.b16 %v292
  %v1417 = vunpack.c.h.b16 %v292
  %v1418 = vunpack.c.l.b16 %v293
  %v1419 = vunpack.c.h.b16 %v293
  %v1420 = vunpack.c.l.b16 %v294
  %v1421 = vunpack.c.h.b16 %v294
  %v1422 = vunpack.c.l.b16 %v295
  %v1423 = vunpack.c.h.b16 %v295
  %v1424 = vunpack.c.l.b16 %v296
  %v1425 = vunpack.c.h.b16 %v296
  %v1426 = vunpack.c.l.b16 %v297
  %v1427 = vunpack.c.h.b16 %v297
  %v1428 = vunpack.c.l.b16 %v298
  %v1429 = vunpack.c.h.b16 %v298
  %v1430 = vunpack.c.l.b16 %v299
  %v1431 = vunpack.c.h.b16 %v299
  %v1432 = vunpack.c.l.b16 %v300
  %v1433 = vunpack.c.h.b16 %v300
  %v1434 = vunpack.c.l.b16 %v301
  %v1435 = vunpack.c.h.b16 %v301
  %v1436 = vunpack.c.l.b16 %v302
  %v1437 = vunpack.c.h.b16 %v302
  %v1438 = vunpack.c.l.b16 %v303
  %v1439 = vunpack.c.h.b16 %v303
  %v1440 = vunpack.c.l.b16 %v304
  %v1441 = vunpack.c.h.b16 %v304
  %v1442 = vunpack.c.l.b16 %v305
  %v1443 = vunpack.c.h.b16 %v305
  %v1444 = vunpack.c.l.b16 %v306
  %v1445 = vunpack.c.h.b16 %v306
  %v1446 = vunpack.c.l.b16 %v307
  %v1447 = vunpack.c.h.b16 %v307
  %v1448 = vunpack.c.l.b16 %v308
  %v1449 = vunpack.c.h.b16 %v308
  %v1450 = vunpack.c.l.b16 %v309
  %v1451 = vunpack.c.h.b16 %v309
  %v1452 = vunpack.c.l.b16 %v310
  %v1453 = vunpack.c.h.b16 %v310
  %v1454 = vunpack.c.l.b16 %v311
  %v1455 = vunpack.c.h.b16 %v311
  %v1456 = vunpack.c.l.b16 %v312
  %v1457 = vunpack.c.h.b16 %v312
  %v1458 = vunpack.c.l.b16 %v313
  %v1459 = vunpack.c.h.b16 %v313
  %v1460 = vunpack.c.l.b16 %v314
  %v1461 = vunpack.c.h.b16 %v314
  %v1462 = vunpack.c.l.b16 %v315
  %v1463 = vunpack.c.h.b16 %v315
  %v1464 = vunpack.c.l.b16 %v316
  %v1465 = vunpack.c.h.b16 %v316
  %v1466 = vunpack.c.l.b16 %v317
  %v1467 = vunpack.c.h.b16 %v317
  %v1468 = vunpack.c.l.b16 %v318
  %v1469 = vunpack.c.h.b16 %v318
  %v1470 = vunpack.c.l.b16 %v319
  %v1471 = vunpack.c.h.b16 %v319
  %v1472 = vunpack.c.l.b16 %v320
  %v1473 = vunpack.c.h.b16 %v320
  %v1474 = vunpack.c.l.b16 %v321
  %v1475 = vunpack.c.h.b16 %v321
  %v1476 = vunpack.c.l.b16 %v322
  %v1477 = vunpack.c.h.b16 %v322
  %v1478 = vunpack.c.l.b16 %v323
  %v1479 = vunpack.c.h.b16 %v323
  %v1480 = vunpack.c.l.b16 %v324
  %v1481 = vunpack.c.h.b16 %v324
  %v1482 = vunpack.c.l.b16 %v325
  %v1483 = vunpack.c.h.b16 %v325
  %v1484 = vunpack.c.l.b16 %v326
  %v1485 = vunpack.c.h.b16 %v326
  %v1486 = vunpack.c.l.b16 %v327
  %v1487 = vunpack.c.h.b16 %v327
  %v1488 = vunpack.c.l.b16 %v328
  %v1489 = vunpack.c.h.b16 %v328
  %v1490 = vunpack.c.l.b16 %v329
  %v1491 = vunpack.c.h.b16 %v329
  %v1492 = vunpack.c.l.b16 %v330
  %v1493 = vunpack.c.h.b16 %v330
  %v1494 = vunpack.c.l.b16 %v331
  %v1495 = vunpack.c.h.b16 %v331
  %v1496 = vunpack.c.l.b16 %v332
  %v1497 = vunpack.c.h.b16 %v332
  %v1498 = vunpack.c.l.b16 %v333
  %v1499 = vunpack.c.h.b16 %v333
  %v1500 = vunpack.c.l.b16 %v334
  %v1501 = vunpack.c.h.b16 %v334
  %v1502 = vunpack.c.l.b16 %v335
  %v1503 = vunpack.c.h.b16 %v335
  %v1504 = vunpack.c.l.b16 %v336
  %v1505 = vunpack.c.h.b16 %v336
  %v1506 = vunpack.c.l.b16 %v337
  %v1507 = vunpack.c.h.b16 %v337
  %v1508 = vunpack.c.l.b16 %v338
  %v1509 = vunpack.c.h.b16 %v338
  %v1510 = vunpack.c.l.b16 %v339
  %v1511 = vunpack.c.h.b16 %v339
  %v1512 = vunpack.c.l.b16 %v340
  %v1513 = vunpack.c.h.b16 %v340
  %v1514 = vunpack.c.l.b16 %v341
  %v1515 = vunpack.c.h.b16 %v341
  %v1516 = vunpack.c.l.b16 %v342
  %v1517 = vunpack.c.h.b16 %v342
  %v1518 = vunpack.c.l.b16 %v343
  %v1519 = vunpack.c.h.b16 %v343
  %v1520 = vunpack.c.l.b16 %v344
  %v1521 = vunpack.c.h.b16 %v344
  %v1522 = vunpack.c.l.b16 %v345
  %v1523 = vunpack.c.h.b16 %v345
  %v1524 = vunpack.c.l.b16 %v346
  %v1525 = vunpack.c.h.b16 %v346
  %v1526 = vunpack.c.l.b16 %v347
  %v1527 = vunpack.c.h.b16 %v347
  %v1528 = vunpack.c.l.b16 %v348
  %v1529 = vunpack.c.h.b16 %v348
  %v1530 = vunpack.c.l.b16 %v349
  %v1531 = vunpack.c.h.b16 %v349
  %v1532 = vunpack.c.l.b16 %v350
  %v1533 = vunpack.c.h.b16 %v350
  %v1534 = vunpack.c.l.b16 %v351
  %v1535 = vunpack.c.h.b16 %v351
  %v1536 = vunpack.c.l.b16 %v352
  %v1537 = vunpack.c.h.b16 %v352
  %v1538 = vunpack.c.l.b16 %v353
  %v1539 = vunpack.c.h.b16 %v353
  %v1540 = vunpack.c.l.b16 %v354
  %v1541 = vunpack.c.h.b16 %v354
  %v1542 = vunpack.c.l.b16 %v355
  %v1543 = vunpack.c.h.b16 %v355
  %v1544 = vunpack.c.l.b16 %v356
  %v1545 = vunpack.c.h.b16 %v356
  %v1546 = vunpack.c.l.b16 %v357
  %v1547 = vunpack.c.h.b16 %v357
  %v1548 = vunpack.c.l.b16 %v358
  %v1549 = vunpack.c.h.b16 %v358
  %v1550 = vunpack.c.l.b16 %v359
  %v1551 = vunpack.c.h.b16 %v359
  %v1552 = vunpack.c.l.b16 %v360
  %v1553 = vunpack.c.h.b16 %v360
  %v1554 = vunpack.c.l.b16 %v361
  %v1555 = vunpack.c.h.b16 %v361
  %v1556 = vunpack.c.l.b16 %v362
  %v1557 = vunpack.c.h.b16 %v362
  %v1558 = vunpack.c.l.b16 %v363
  %v1559 = vunpack.c.h.b16 %v363
  %v1560 = vunpack.c.l.b16 %v364
  %v1561 = vunpack.c.h.b16 %v364
  %v1562 = vunpack.c.l.b16 %v365
  %v1563 = vunpack.c.h.b16 %v365
  %v1564 = vunpack.c.l.b16 %v366
  %v1565 = vunpack.c.h.b16 %v366
  %v1566 = vunpack.c.l.b16 %v367
  %v1567 = vunpack.c.h.b16 %v367
  %v1568 = vunpack.c.l.b16 %v368
  %v1569 = vunpack.c.h.b16 %v368
  %v1570 = vunpack.c.l.b16 %v369
  %v1571 = vunpack.c.h.b16 %v369
  %v1572 = vunpack.c.l.b16 %v370
  %v1573 = vunpack.c.h.b16 %v370
  %v1574 = vunpack.c.l.b16 %v371
  %v1575 = vunpack.c.h.b16 %v371
  %v1576 = vunpack.c.l.b16 %v372
  %v1577 = vunpack.c.h.b16 %v372
  %v1578 = vunpack.c.l.b16 %v373
  %v1579 = vunpack.c.h.b16 %v373
  %v1580 = vunpack.c.l.b16 %v374
  %v1581 = vunpack.c.h.b16 %v374
  %v1582 = vunpack.c.l.b16 %v375
  %v1583 = vunpack.c.h.b16 %v375
  %v1584 = vunpack.c.l.b16 %v376
  %v1585 = vunpack.c.h.b16 %v376
  %v1586 = vunpack.c.l.b16 %v377
  %v1587 = vunpack.c.h.b16 %v377
  %v1588 = vunpack.c.l.b16 %v378
  %v1589 = vunpack.c.h.b16 %v378
  %v1590 = vunpack.c.l.b16 %v379
  %v1591 = vunpack.c.h.b16 %v379
  %v1592 = vunpack.c.l.b16 %v380
  %v1593 = vunpack.c.h.b16 %v380
  %v1594 = vunpack.c.l.b16 %v381
  %v1595 = vunpack.c.h.b16 %v381
  %v1596 = vunpack.c.l.b16 %v382
  %v1597 = vunpack.c.h.b16 %v382
  %v1598 = vunpack.c.l.b16 %v383
  %v1599 = vunpack.c.h.b16 %v383
  %v1600 = vunpack.c.l.b16 %v384
  %v1601 = vunpack.c.h.b16 %v384
  %v1602 = vunpack.c.l.b16 %v385
  %v1603 = vunpack.c.h.b16 %v385
  %v1604 = vunpack.c.l.b16 %v386
  %v1605 = vunpack.c.h.b16 %v386
  %v1606 = vunpack.c.l.b16 %v387
  %v1607 = vunpack.c.h.b16 %v387
  %v1608 = vunpack.c.l.b16 %v388
  %v1609 = vunpack.c.h.b16 %v388
  %v1610 = vunpack.c.l.b16 %v389
  %v1611 = vunpack.c.h.b16 %v389
  %v1612 = vunpack.c.l.b16 %v390
  %v1613 = vunpack.c.h.b16 %v390
  %v1614 = vunpack.c.l.b16 %v391
  %v1615 = vunpack.c.h.b16 %v391
  %v1616 = vunpack.c.l.b16 %v392
  %v1617 = vunpack.c.h.b16 %v392
  %v1618 = vunpack.c.l.b16 %v393
  %v1619 = vunpack.c.h.b16 %v393
  %v1620 = vunpack.c.l.b16 %v394
  %v1621 = vunpack.c.h.b16 %v394
  %v1622 = vunpack.c.l.b16 %v395
  %v1623 = vunpack.c.h.b16 %v395
  %v1624 = vunpack.c.l.b16 %v396
  %v1625 = vunpack.c.h.b16 %v396
  %v1626 = vunpack.c.l.b16 %v397
  %v1627 = vunpack.c.h.b16 %v397
  %v1628 = vunpack.c.l.b16 %v398
  %v1629 = vunpack.c.h.b16 %v398
  %v1630 = vunpack.c.l.b16 %v399
  %v1631 = vunpack.c.h.b16 %v399
  %v1632 = vunpack.c.l.b16 %v400
  %v1633 = vunpack.c.h.b16 %v400
  %v1634 = vunpack.c.l.b16 %v401
  %v1635 = vunpack.c.h.b16 %v401
  %v1636 = vunpack.c.l.b16 %v402
  %v1637 = vunpack.c.h.b16 %v402
  %v1638 = vunpack.c.l.b16 %v403
  %v1639 = vunpack.c.h.b16 %v403
  %v1640 = vunpack.c.l.b16 %v404
  %v1641 = vunpack.c.h.b16 %v404
  %v1642 = vunpack.c.l.b16 %v405
  %v1643 = vunpack.c.h.b16 %v405
  %v1644 = vunpack.c.l.b16 %v406
  %v1645 = vunpack.c.h.b16 %v406
  %v1646 = vunpack.c.l.b16 %v407
  %v1647 = vunpack.c.h.b16 %v407
  %v1648 = vunpack.c.l.b16 %v408
  %v1649 = vunpack.c.h.b16 %v408
  %v1650 = vunpack.c.l.b16 %v409
  %v1651 = vunpack.c.h.b16 %v409
  %v1652 = vunpack.c.l.b16 %v410
  %v1653 = vunpack.c.h.b16 %v410
  %v1654 = vunpack.c.l.b16 %v411
  %v1655 = vunpack.c.h.b16 %v411
  %v1656 = vunpack.c.l.b16 %v412
  %v1657 = vunpack.c.h.b16 %v412
  %v1658 = vunpack.c.l.b16 %v413
  %v1659 = vunpack.c.h.b16 %v413
  %v1660 = vunpack.c.l.b16 %v414
  %v1661 = vunpack.c.h.b16 %v414
  %v1662 = vunpack.c.l.b16 %v415
  %v1663 = vunpack.c.h.b16 %v415
  %v1664 = vunpack.c.l.b16 %v416
  %v1665 = vunpack.c.h.b16 %v416
  %v1666 = vunpack.c.l.b16 %v417
  %v1667 = vunpack.c.h.b16 %v417
  %v1668 = vunpack.c.l.b16 %v418
  %v1669 = vunpack.c.h.b16 %v418
  %v1670 = vunpack.c.l.b16 %v419
  %v1671 = vunpack.c.h.b16 %v419
  %v1672 = vunpack.c.l.b16 %v420
  %v1673 = vunpack.c.h.b16 %v420
  %v1674 = vpack.c.b16 %v898, %v890
  %v1675 = vpack.c.b16 %v899, %v891
  %v1676 = vpack.c.b16 %v900, %v892
  %v1677 = vpack.c.b16 %v901, %v893
  %v1678 = vpack.c.b16 %v902, %v894
  %v1679 = vpack.c.b16 %v903, %v895
  %v1680 = vpack.c.b16 %v904, %v896
  %v1681 = vpack.c.b16 %v905, %v897
  %v1682 = vpack.c.b16 %v914, %v906
  %v1683 = vpack.c.b16 %v915, %v907
  %v1684 = vpack.c.b16 %v916, %v908
  %v1685 = vpack.c.b16 %v917, %v909
  %v1686 = vpack.c.b16 %v918, %v910
  %v1687 = vpack.c.b16 %v919, %v911
  %v1688 = vpack.c.b16 %v920, %v912
  %v1689 = vpack.c.b16 %v921, %v913
  %v1690 = vpack.c.b16 %v930, %v922
  %v1691 = vpack.c.b16 %v931, %v923
  %v1692 = vpack.c.b16 %v932, %v924
  %v1693 = vpack.c.b16 %v933, %v925
  %v1694 = vpack.c.b16 %v934, %v926
  %v1695 = vpack.c.b16 %v935, %v927
  %v1696 = vpack.c.b16 %v936, %v928
  %v1697 = vpack.c.b16 %v937, %v929
  %v1698 = vpack.c.b16 %v946, %v938
  %v1699 = vpack.c.b16 %v947, %v939
  %v1700 = vpack.c.b16 %v948, %v940
  %v1701 = vpack.c.b16 %v949, %v941
  %v1702 = vpack.c.b16 %v950, %v942
  %v1703 = vpack.c.b16 %v951, %v943
  %v1704 = vpack.c.b16 %v952, %v944
  %v1705 = vpack.c.b16 %v953, %v945
  %v1706 = vpack.c.b16 %v962, %v954
  %v1707 = vpack.c.b16 %v963, %v955
  %v1708 = vpack.c.b16 %v964, %v956
  %v1709 = vpack.c.b16 %v965, %v957
  %v1710 = vpack.c.b16 %v966, %v958
  %v1711 = vpack.c.b16 %v967, %v959
  %v1712 = vpack.c.b16 %v968, %v960
  %v1713 = vpack.c.b16 %v969, %v961
  %v1714 = vpack.c.b16 %v978, %v970
  %v1715 = vpack.c.b16 %v979, %v971
  %v1716 = vpack.c.b16 %v980, %v972
  %v1717 = vpack.c.b16 %v981, %v973
  %v1718 = vpack.c.b16 %v982, %v974
  %v1719 = vpack.c.b16 %v983, %v975
  %v1720 = vpack.c.b16 %v984, %v976
  %v1721 = vpack.c.b16 %v985, %v977
  %v1722 = vpack.c.b16 %v994, %v986
  %v1723 = vpack.c.b16 %v995, %v987
  %v1724 = vpack.c.b16 %v996, %v988
  %v1725 = vpack.c.b16 %v997, %v989
  %v1726 = vpack.c.b16 %v998, %v990
  %v1727 = vpack.c.b16 %v999, %v991
  %v1728 = vpack.c.b16 %v1000, %v992
  %v1729 = vpack.c.b16 %v1001, %v993
  %v1730 = vpack.c.b16 %v1010, %v1002
  %v1731 = vpack.c.b16 %v1011, %v1003
  %v1732 = vpack.c.b16 %v1012, %v1004
  %v1733 = vpack.c.b16 %v1013, %v1005
  %v1734 = vpack.c.b16 %v1014, %v1006
  %v1735 = vpack.c.b16 %v1015, %v1007
  %v1736 = vpack.c.b16 %v1016, %v1008
  %v1737 = vpack.c.b16 %v1017, %v1009
  %v1738 = vpack.c.b16 %v1026, %v1018
  %v1739 = vpack.c.b16 %v1027, %v1019
  %v1740 = vpack.c.b16 %v1028, %v1020
  %v1741 = vpack.c.b16 %v1029, %v1021
  %v1742 = vpack.c.b16 %v1030, %v1022
  %v1743 = vpack.c.b16 %v1031, %v1023
  %v1744 = vpack.c.b16 %v1032, %v1024
  %v1745 = vpack.c.b16 %v1033, %v1025
  %v1746 = vpack.c.b16 %v1042, %v1034
  %v1747 = vpack.c.b16 %v1043, %v1035
  %v1748 = vpack.c.b16 %v1044, %v1036
  %v1749 = vpack.c.b16 %v1045, %v1037
  %v1750 = vpack.c.b16 %v1046, %v1038
  %v1751 = vpack.c.b16 %v1047, %v1039
  %v1752 = vpack.c.b16 %v1048, %v1040
  %v1753 = vpack.c.b16 %v1049, %v1041
  %v1754 = vpack.c.b16 %v1058, %v1050
  %v1755 = vpack.c.b16 %v1059, %v1051
  %v1756 = vpack.c.b16 %v1060, %v1052
  %v1757 = vpack.c.b16 %v1061, %v1053
  %v1758 = vpack.c.b16 %v1062, %v1054
  %v1759 = vpack.c.b16 %v1063, %v1055
  %v1760 = vpack.c.b16 %v1064, %v1056
  %v1761 = vpack.c.b16 %v1065, %v1057
  %v1762 = vpack.c.b16 %v1074, %v1066
  %v1763 = vpack.c.b16 %v1075, %v1067
  %v1764 = vpack.c.b16 %v1076, %v1068
  %v1765 = vpack.c.b16 %v1077, %v1069
  %v1766 = vpack.c.b16 %v1078, %v1070
  %v1767 = vpack.c.b16 %v1079, %v1071
  %v1768 = vpack.c.b16 %v1080, %v1072
  %v1769 = vpack.c.b16 %v1081, %v1073
  %v1770 = vpack.c.b16 %v1090, %v1082
  %v1771 = vpack.c.b16 %v1091, %v1083
  %v1772 = vpack.c.b16 %v1092, %v1084
  %v1773 = vpack.c.b16 %v1093, %v1085
  %v1774 = vpack.c.b16 %v1094, %v1086
  %v1775 = vpack.c.b16 %v1095, %v1087
  %v1776 = vpack.c.b16 %v1096, %v1088
  %v1777 = vpack.c.b16 %v1097, %v1089
  %v1778 = vpack.c.b16 %v1106, %v1098
  %v1779 = vpack.c.b16 %v1107, %v1099
  %v1780 = vpack.c.b16 %v1108, %v1100
  %v1781 = vpack.c.b16 %v1109, %v1101
  %v1782 = vpack.c.b16 %v1110, %v1102
  %v1783 = vpack.c.b16 %v1111, %v1103
  %v1784 = vpack.c.b16 %v1112, %v1104
  %v1785 = vpack.c.b16 %v1113, %v1105
  %v1786 = vpack.c.b16 %v1122, %v1114
  %v1787 = vpack.c.b16 %v1123, %v1115
  %v1788 = vpack.c.b16 %v1124, %v1116
  %v1789 = vpack.c.b16 %v1125, %v1117
  %v1790 = vpack.c.b16 %v1126, %v1118
  %v1791 = vpack.c.b16 %v1127, %v1119
  %v1792 = vpack.c.b16 %v1128, %v1120
  %v1793 = vpack.c.b16 %v1129, %v1121
  %v1794 = vpack.c.b16 %v1138, %v1130
  %v1795 = vpack.c.b16 %v1139, %v1131
  %v1796 = vpack.c.b16 %v1140, %v1132
  %v1797 = vpack.c.b16 %v1141, %v1133
  %v1798 = vpack.c.b16 %v1142, %v1134
  %v1799 = vpack.c.b16 %v1143, %v1135
  %v1800 = vpack.c.b16 %v1144, %v1136
  %v1801 = vpack.c.b16 %v1145, %v1137
  %v1802 = vpack.c.b16 %v1154, %v1146
  %v1803 = vpack.c.b16 %v1155, %v1147
  %v1804 = vpack.c.b16 %v1156, %v1148
  %v1805 = vpack.c.b16 %v1157, %v1149
  %v1806 = vpack.c.b16 %v1158, %v1150
  %v1807 = vpack.c.b16 %v1159, %v1151
  %v1808 = vpack.c.b16 %v1160, %v1152
  %v1809 = vpack.c.b16 %v1161, %v1153
  %v1810 = vpack.c.b16 %v1170, %v1162
  %v1811 = vpack.c.b16 %v1171, %v1163
  %v1812 = vpack.c.b16 %v1172, %v1164
  %v1813 = vpack.c.b16 %v1173, %v1165
  %v1814 = vpack.c.b16 %v1174, %v1166
  %v1815 = vpack.c.b16 %v1175, %v1167
  %v1816 = vpack.c.b16 %v1176, %v1168
  %v1817 = vpack.c.b16 %v1177, %v1169
  %v1818 = vpack.c.b16 %v1186, %v1178
  %v1819 = vpack.c.b16 %v1187, %v1179
  %v1820 = vpack.c.b16 %v1188, %v1180
  %v1821 = vpack.c.b16 %v1189, %v1181
  %v1822 = vpack.c.b16 %v1190, %v1182
  %v1823 = vpack.c.b16 %v1191, %v1183
  %v1824 = vpack.c.b16 %v1192, %v1184
  %v1825 = vpack.c.b16 %v1193, %v1185
  %v1826 = vpack.c.b16 %v1202, %v1194
  %v1827 = vpack.c.b16 %v1203, %v1195
  %v1828 = vpack.c.b16 %v1204, %v1196
  %v1829 = vpack.c.b16 %v1205, %v1197
  %v1830 = vpack.c.b16 %v1206, %v1198
  %v1831 = vpack.c.b16 %v1207, %v1199
  %v1832 = vpack.c.b16 %v1208, %v1200
  %v1833 = vpack.c.b16 %v1209, %v1201
  %v1834 = vpack.c.b16 %v1218, %v1210
  %v1835 = vpack.c.b16 %v1219, %v1211
  %v1836 = vpack.c.b16 %v1220, %v1212
  %v1837 = vpack.c.b16 %v1221, %v1213
  %v1838 = vpack.c.b16 %v1222, %v1214
  %v1839 = vpack.c.b16 %v1223, %v1215
  %v1840 = vpack.c.b16 %v1224, %v1216
  %v1841 = vpack.c.b16 %v1225, %v1217
  %v1842 = vpack.c.b16 %v1234, %v1226
  %v1843 = vpack.c.b16 %v1235, %v1227
  %v1844 = vpack.c.b16 %v1236, %v1228
  %v1845 = vpack.c.b16 %v1237, %v1229
  %v1846 = vpack.c.b16 %v1238, %v1230
  %v1847 = vpack.c.b16 %v1239, %v1231
  %v1848 = vpack.c.b16 %v1240, %v1232
  %v1849 = vpack.c.b16 %v1241, %v1233
  %v1850 = vpack.c.b16 %v1250, %v1242
  %v1851 = vpack.c.b16 %v1251, %v1243
  %v1852 = vpack.c.b16 %v1252, %v1244
  %v1853 = vpack.c.b16 %v1253, %v1245
  %v1854 = vpack.c.b16 %v1254, %v1246
  %v1855 = vpack.c.b16 %v1255, %v1247
  %v1856 = vpack.c.b16 %v1256, %v1248
  %v1857 = vpack.c.b16 %v1257, %v1249
  %v1858 = vpack.c.b16 %v1266, %v1258
  %v1859 = vpack.c.b16 %v1267, %v1259
  %v1860 = vpack.c.b16 %v1268, %v1260
  %v1861 = vpack.c.b16 %v1269, %v1261
  %v1862 = vpack.c.b16 %v1270, %v1262
  %v1863 = vpack.c.b16 %v1271, %v1263
  %v1864 = vpack.c.b16 %v1272, %v1264
  %v1865 = vpack.c.b16 %v1273, %v1265
  %v1866 = vpack.c.b16 %v1282, %v1274
  %v1867 = vpack.c.b16 %v1283, %v1275
  %v1868 = vpack.c.b16 %v1284, %v1276
  %v1869 = vpack.c.b16 %v1285, %v1277
  %v1870 = vpack.c.b16 %v1286, %v1278
  %v1871 = vpack.c.b16 %v1287, %v1279
  %v1872 = vpack.c.b16 %v1288, %v1280
  %v1873 = vpack.c.b16 %v1289, %v1281
  %v1874 = vpack.c.b16 %v1298, %v1290
  %v1875 = vpack.c.b16 %v1299, %v1291
  %v1876 = vpack.c.b16 %v1300, %v1292
  %v1877 = vpack.c.b16 %v1301, %v1293
  %v1878 = vpack.c.b16 %v1302, %v1294
  %v1879 = vpack.c.b16 %v1303, %v1295
  %v1880 = vpack.c.b16 %v1304, %v1296
  %v1881 = vpack.c.b16 %v1305, %v1297
  %v1882 = vpack.c.b16 %v1314, %v1306
  %v1883 = vpack.c.b16 %v1315, %v1307
  %v1884 = vpack.c.b16 %v1316, %v1308
  %v1885 = vpack.c.b16 %v1317, %v1309
  %v1886 = vpack.c.b16 %v1318, %v1310
  %v1887 = vpack.c.b16 %v1319, %v1311
  %v1888 = vpack.c.b16 %v1320, %v1312
  %v1889 = vpack.c.b16 %v1321, %v1313
  %v1890 = vpack.c.b16 %v1330, %v1322
  %v1891 = vpack.c.b16 %v1331, %v1323
  %v1892 = vpack.c.b16 %v1332, %v1324
  %v1893 = vpack.c.b16 %v1333, %v1325
  %v1894 = vpack.c.b16 %v1334, %v1326
  %v1895 = vpack.c.b16 %v1335, %v1327
  %v1896 = vpack.c.b16 %v1336, %v1328
  %v1897 = vpack.c.b16 %v1337, %v1329
  %v1898 = vpack.c.b16 %v1346, %v1338
  %v1899 = vpack.c.b16 %v1347, %v1339
  %v1900 = vpack.c.b16 %v1348, %v1340
  %v1901 = vpack.c.b16 %v1349, %v1341
  %v1902 = vpack.c.b16 %v1350, %v1342
  %v1903 = vpack.c.b16 %v1351, %v1343
  %v1904 = vpack.c.b16 %v1352, %v1344
  %v1905 = vpack.c.b16 %v1353, %v1345
  %v1906 = vpack.c.b16 %v1362, %v1354
  %v1907 = vpack.c.b16 %v1363, %v1355
  %v1908 = vpack.c.b16 %v1364, %v1356
  %v1909 = vpack.c.b16 %v1365, %v1357
  %v1910 = vpack.c.b16 %v1366, %v1358
  %v1911 = vpack.c.b16 %v1367, %v1359
  %v1912 = vpack.c.b16 %v1368, %v1360
  %v1913 = vpack.c.b16 %v1369, %v1361
  %v1914 = vpack.c.b16 %v1378, %v1370
  %v1915 = vpack.c.b16 %v1379, %v1371
  %v1916 = vpack.c.b16 %v1380, %v1372
  %v1917 = vpack.c.b16 %v1381, %v1373
  %v1918 = vpack.c.b16 %v1382, %v1374
  %v1919 = vpack.c.b16 %v1383, %v1375
  %v1920 = vpack.c.b16 %v1384, %v1376
  %v1921 = vpack.c.b16 %v1385, %v1377
  %v1922 = vpack.c.b16 %v1394, %v1386
  %v1923 = vpack.c.b16 %v1395, %v1387
  %v1924 = vpack.c.b16 %v1396, %v1388
  %v1925 = vpack.c.b16 %v1397, %v1389
  %v1926 = vpack.c.b16 %v1398, %v1390
  %v1927 = vpack.c.b16 %v1399, %v1391
  %v1928 = vpack.c.b16 %v1400, %v1392
  %v1929 = vpack.c.b16 %v1401, %v1393
  %v1930 = vpack.c.b16 %v1410, %v1402
  %v1931 = vpack.c.b16 %v1411, %v1403
  %v1932 = vpack.c.b16 %v1412, %v1404
  %v1933 = vpack.c.b16 %v1413, %v1405
  %v1934 = vpack.c.b16 %v1414, %v1406
  %v1935 = vpack.c.b16 %v1415, %v1407
  %v1936 = vpack.c.b16 %v1416, %v1408
  %v1937 = vpack.c.b16 %v1417, %v1409
  %v1938 = vpack.c.b16 %v1426, %v1418
  %v1939 = vpack.c.b16 %v1427, %v1419
  %v1940 = vpack.c.b16 %v1428, %v1420
  %v1941 = vpack.c.b16 %v1429, %v1421
  %v1942 = vpack.c.b16 %v1430, %v1422
  %v1943 = vpack.c.b16 %v1431, %v1423
  %v1944 = vpack.c.b16 %v1432, %v1424
  %v1945 = vpack.c.b16 %v1433, %v1425
  %v1946 = vpack.c.b16 %v1442, %v1434
  %v1947 = vpack.c.b16 %v1443, %v1435
  %v1948 = vpack.c.b16 %v1444, %v1436
  %v1949 = vpack.c.b16 %v1445, %v1437
  %v1950 = vpack.c.b16 %v1446, %v1438
  %v1951 = vpack.c.b16 %v1447, %v1439
  %v1952 = vpack.c.b16 %v1448, %v1440
  %v1953 = vpack.c.b16 %v1449, %v1441
  %v1954 = vpack.c.b16 %v1458, %v1450
  %v1955 = vpack.c.b16 %v1459, %v1451
  %v1956 = vpack.c.b16 %v1460, %v1452
  %v1957 = vpack.c.b16 %v1461, %v1453
  %v1958 = vpack.c.b16 %v1462, %v1454
  %v1959 = vpack.c.b16 %v1463, %v1455
  %v1960 = vpack.c.b16 %v1464, %v1456
  %v1961 = vpack.c.b16 %v1465, %v1457
  %v1962 = vpack.c.b16 %v1474, %v1466
  %v1963 = vpack.c.b16 %v1475, %v1467
  %v1964 = vpack.c.b16 %v1476, %v1468
  %v1965 = vpack.c.b16 %v1477, %v1469
  %v1966 = vpack.c.b16 %v1478, %v1470
  %v1967 = vpack.c.b16 %v1479, %v1471
  %v1968 = vpack.c.b16 %v1480, %v1472
  %v1969 = vpack.c.b16 %v1481, %v1473
  %v1970 = vpack.c.b16 %v1490, %v1482
  %v1971 = vpack.c.b16 %v1491, %v1483
  %v1972 = vpack.c.b16 %v1492, %v1484
  %v1973 = vpack.c.b16 %v1493, %v1485
  %v1974 = vpack.c.b16 %v1494, %v1486
  %v1975 = vpack.c.b16 %v1495, %v1487
  %v1976 = vpack.c.b16 %v1496, %v1488
  %v1977 = vpack.c.b16 %v1497, %v1489
  %v1978 = vpack.c.b16 %v1506, %v1498
  %v1979 = vpack.c.b16 %v1507, %v1499
  %v1980 = vpack.c.b16 %v1508, %v1500
  %v1981 = vpack.c.b16 %v1509, %v1501
  %v1982 = vpack.c.b16 %v1510, %v1502
  %v1983 = vpack.c.b16 %v1511, %v1503
  %v1984 = vpack.c.b16 %v1512, %v1504
  %v1985 = vpack.c.b16 %v1513, %v1505
  %v1986 = vpack.c.b16 %v1522, %v1514
  %v1987 = vpack.c.b16 %v1523, %v1515
  %v1988 = vpack.c.b16 %v1524, %v1516
  %v1989 = vpack.c.b16 %v1525, %v1517
  %v1990 = vpack.c.b16 %v1526, %v1518
  %v1991 = vpack.c.b16 %v1527, %v1519
  %v1992 = vpack.c.b16 %v1528, %v1520
  %v1993 = vpack.c.b16 %v1529, %v1521
  %v1994 = vpack.c.b16 %v1538, %v1530
  %v1995 = vpack.c.b16 %v1539, %v1531
  %v1996 = vpack.c.b16 %v1540, %v1532
  %v1997 = vpack.c.b16 %v1541, %v1533
  %v1998 = vpack.c.b16 %v1542, %v1534
  %v1999 = vpack.c.b16 %v1543, %v1535
  %v2000 = vpack.c.b16 %v1544, %v1536
  %v2001 = vpack.c.b16 %v1545, %v1537
  %v2002 = vpack.c.b16 %v1554, %v1546
  %v2003 = vpack.c.b16 %v1555, %v1547
  %v2004 = vpack.c.b16 %v1556, %v1548
  %v2005 = vpack.c.b16 %v1557, %v1549
  %v2006 = vpack.c.b16 %v1558, %v1550
  %v2007 = vpack.c.b16 %v1559, %v1551
  %v2008 = vpack.c.b16 %v1560, %v1552
  %v2009 = vpack.c.b16 %v1561, %v1553
  %v2010 = vpack.c.b16 %v1570, %v1562
  %v2011 = vpack.c.b16 %v1571, %v1563
  %v2012 = vpack.c.b16 %v1572, %v1564
  %v2013 = vpack.c.b16 %v1573, %v1565
  %v2014 = vpack.c.b16 %v1574, %v1566
  %v2015 = vpack.c.b16 %v1575, %v1567
  %v2016 = vpack.c.b16 %v1576, %v1568
  %v2017 = vpack.c.b16 %v1577, %v1569
  %v2018 = vpack.c.b16 %v1586, %v1578
  %v2019 = vpack.c.b16 %v1587, %v1579
  %v2020 = vpack.c.b16 %v1588, %v1580
  %v2021 = vpack.c.b16 %v1589, %v1581
  %v2022 = vpack.c.b16 %v1590, %v1582
  %v2023 = vpack.c.b16 %v1591, %v1583
  %v2024 = vpack.c.b16 %v1592, %v1584
  %v2025 = vpack.c.b16 %v1593, %v1585
  %v2026 = vpack.c.b16 %v1602, %v1594
  %v2027 = vpack.c.b16 %v1603, %v1595
  %v2028 = vpack.c.b16 %v1604, %v1596
  %v2029 = vpack.c.b16 %v1605, %v1597
  %v2030 = vpack.c.b16 %v1606, %v1598
  %v2031 = vpack.c.b16 %v1607, %v1599
  %v2032 = vpack.c.b16 %v1608, %v1600
  %v2033 = vpack.c.b16 %v1609, %v1601
  %v2034 = vpack.c.b16 %v1618, %v1610
  %v2035 = vpack.c.b16 %v1619, %v1611
  %v2036 = vpack.c.b16 %v1620, %v1612
  %v2037 = vpack.c.b16 %v1621, %v1613
  %v2038 = vpack.c.b16 %v1622, %v1614
  %v2039 = vpack.c.b16 %v1623, %v1615
  %v2040 = vpack.c.b16 %v1624, %v1616
  %v2041 = vpack.c.b16 %v1625, %v1617
  %v2042 = vpack.c.b16 %v1634, %v1626
  %v2043 = vpack.c.b16 %v1635, %v1627
  %v2044 = vpack.c.b16 %v1636, %v1628
  %v2045 = vpack.c.b16 %v1637, %v1629
  %v2046 = vpack.c.b16 %v1638, %v1630
  %v2047 = vpack.c.b16 %v1639, %v1631
  %v2048 = vpack.c.b16 %v1640, %v1632
  %v2049 = vpack.c.b16 %v1641, %v1633
  %v2050 = vpack.c.b16 %v1650, %v1642
  %v2051 = vpack.c.b16 %v1651, %v1643
  %v2052 = vpack.c.b16 %v1652, %v1644
  %v2053 = vpack.c.b16 %v1653, %v1645
  %v2054 = vpack.c.b16 %v1654, %v1646
  %v2055 = vpack.c.b16 %v1655, %v1647
  %v2056 = vpack.c.b16 %v1656, %v1648
  %v2057 = vpack.c.b16 %v1657, %v1649
  %v2058 = vpack.c.b16 %v1666, %v1658
  %v2059 = vpack.c.b16 %v1667, %v1659
  %v2060 = vpack.c.b16 %v1668, %v1660
  %v2061 = vpack.c.b16 %v1669, %v1661
  %v2062 = vpack.c.b16 %v1670, %v1662
  %v2063 = vpack.c.b16 %v1671, %v1663
  %v2064 = vpack.c.b16 %v1672, %v1664
  %v2065 = vpack.c.b16 %v1673, %v1665
  %vm2458 = vcmask 130048
  %v2460 = vsel %vm2458, %v491, 0
  %2462 = vmatprep.subr.bf16.mxu0 %v1675
  %2463 = vmatpush1.bf16.msra.mxu0 %v1674
  %2464 = vmatprep.subr.bf16.mxu0 %v1683
  %2465 = vmatpush1.bf16.msra.mxu0 %v1682
  %2466 = vmatprep.subr.bf16.mxu0 %v1691
  %2467 = vmatpush1.bf16.msra.mxu0 %v1690
  %2468 = vmatprep.subr.bf16.mxu0 %v1699
  %2469 = vmatpush1.bf16.msra.mxu0 %v1698
  %2470 = vmatprep.subr.bf16.mxu0 %v1707
  %2471 = vmatpush1.bf16.msra.mxu0 %v1706
  %2472 = vmatprep.subr.bf16.mxu0 %v1715
  %2473 = vmatpush1.bf16.msra.mxu0 %v1714
  %2474 = vmatprep.subr.bf16.mxu0 %v1723
  %2475 = vmatpush1.bf16.msra.mxu0 %v1722
  %2476 = vmatprep.subr.bf16.mxu0 %v1731
  %2477 = vmatpush1.bf16.msra.mxu0 %v1730
  %2478 = vmatprep.subr.bf16.mxu0 %v1739
  %2479 = vmatpush1.bf16.msra.mxu0 %v1738
  %2480 = vmatprep.subr.bf16.mxu0 %v1747
  %2481 = vmatpush1.bf16.msra.mxu0 %v1746
  %2482 = vmatprep.subr.bf16.mxu0 %v1755
  %2483 = vmatpush1.bf16.msra.mxu0 %v1754
  %2484 = vmatprep.subr.bf16.mxu0 %v1763
  %2485 = vmatpush1.bf16.msra.mxu0 %v1762
  %2486 = vmatprep.subr.bf16.mxu0 %v1771
  %2487 = vmatpush1.bf16.msra.mxu0 %v1770
  %2488 = vmatprep.subr.bf16.mxu0 %v1779
  %2489 = vmatpush1.bf16.msra.mxu0 %v1778
  %2490 = vmatprep.subr.bf16.mxu0 %v1787
  %2491 = vmatpush1.bf16.msra.mxu0 %v1786
  %2492 = vmatprep.subr.bf16.mxu0 %v1795
  %2493 = vmatpush1.bf16.msra.mxu0 %v1794
  %2494 = vmatprep.mubr.bf16.mxu0 %v486
  %2495 = vmatmul.mubr.bf16.gmra.mrb[0].mxu0 %v485
  %v2496 = vpop.f32.mrb[0].mxu0
  %v2497 = vadd.f32 %v426, %v2496
  %v2498 = vpop.f32.mrb[0].mxu0
  %v2499 = vadd.f32 %v430, %v2498
  %v2500 = vpop.f32.mrb[0].mxu0
  %v2501 = vadd.f32 %v426, %v2500
  %v2502 = vpop.f32.mrb[0].mxu0
  %v2503 = vadd.f32 %v430, %v2502
  %2504 = vdwg.mxu0
  %2505 = vmatprep.subr.bf16.mxu0 %v1803
  %2506 = vmatpush1.bf16.msra.mxu0 %v1802
  %2507 = vmatprep.subr.bf16.mxu0 %v1811
  %2508 = vmatpush1.bf16.msra.mxu0 %v1810
  %2509 = vmatprep.subr.bf16.mxu0 %v1819
  %2510 = vmatpush1.bf16.msra.mxu0 %v1818
  %2511 = vmatprep.subr.bf16.mxu0 %v1827
  %2512 = vmatpush1.bf16.msra.mxu0 %v1826
  %2513 = vmatprep.subr.bf16.mxu0 %v1835
  %2514 = vmatpush1.bf16.msra.mxu0 %v1834
  %2515 = vmatprep.subr.bf16.mxu0 %v1843
  %2516 = vmatpush1.bf16.msra.mxu0 %v1842
  %2517 = vmatprep.subr.bf16.mxu0 %v1851
  %2518 = vmatpush1.bf16.msra.mxu0 %v1850
  %2519 = vmatprep.subr.bf16.mxu0 %v1859
  %2520 = vmatpush1.bf16.msra.mxu0 %v1858
  %2521 = vmatprep.subr.bf16.mxu0 %v1867
  %2522 = vmatpush1.bf16.msra.mxu0 %v1866
  %2523 = vmatprep.subr.bf16.mxu0 %v1875
  %2524 = vmatpush1.bf16.msra.mxu0 %v1874
  %2525 = vmatprep.subr.bf16.mxu0 %v1883
  %2526 = vmatpush1.bf16.msra.mxu0 %v1882
  %2527 = vmatprep.subr.bf16.mxu0 %v1891
  %2528 = vmatpush1.bf16.msra.mxu0 %v1890
  %2529 = vmatprep.subr.bf16.mxu0 %v1899
  %2530 = vmatpush1.bf16.msra.mxu0 %v1898
  %2531 = vmatprep.subr.bf16.mxu0 %v1907
  %2532 = vmatpush1.bf16.msra.mxu0 %v1906
  %2533 = vmatprep.subr.bf16.mxu0 %v1915
  %2534 = vmatpush1.bf16.msra.mxu0 %v1914
  %2535 = vmatprep.subr.bf16.mxu0 %v1923
  %2536 = vmatpush1.bf16.msra.mxu0 %v1922
  %2537 = vmatprep.mubr.bf16.mxu0 %v488
  %2538 = vmatmul.mubr.bf16.gmra.mrb[0].mxu0 %v487
  %v2539 = vpop.f32.mrb[0].mxu0
  %v2540 = vadd.f32 %v2497, %v2539
  %v2541 = vpop.f32.mrb[0].mxu0
  %v2542 = vadd.f32 %v2499, %v2541
  %v2543 = vpop.f32.mrb[0].mxu0
  %v2544 = vadd.f32 %v2501, %v2543
  %v2545 = vpop.f32.mrb[0].mxu0
  %v2546 = vadd.f32 %v2503, %v2545
  %2547 = vdwg.mxu0
  %2548 = vmatprep.subr.bf16.mxu0 %v1931
  %2549 = vmatpush1.bf16.msra.mxu0 %v1930
  %2550 = vmatprep.subr.bf16.mxu0 %v1939
  %2551 = vmatpush1.bf16.msra.mxu0 %v1938
  %2552 = vmatprep.subr.bf16.mxu0 %v1947
  %2553 = vmatpush1.bf16.msra.mxu0 %v1946
  %2554 = vmatprep.subr.bf16.mxu0 %v1955
  %2555 = vmatpush1.bf16.msra.mxu0 %v1954
  %2556 = vmatprep.subr.bf16.mxu0 %v1963
  %2557 = vmatpush1.bf16.msra.mxu0 %v1962
  %2558 = vmatprep.subr.bf16.mxu0 %v1971
  %2559 = vmatpush1.bf16.msra.mxu0 %v1970
  %2560 = vmatprep.subr.bf16.mxu0 %v1979
  %2561 = vmatpush1.bf16.msra.mxu0 %v1978
  %2562 = vmatprep.subr.bf16.mxu0 %v1987
  %2563 = vmatpush1.bf16.msra.mxu0 %v1986
  %2564 = vmatprep.subr.bf16.mxu0 %v1995
  %2565 = vmatpush1.bf16.msra.mxu0 %v1994
  %2566 = vmatprep.subr.bf16.mxu0 %v2003
  %2567 = vmatpush1.bf16.msra.mxu0 %v2002
  %2568 = vmatprep.subr.bf16.mxu0 %v2011
  %2569 = vmatpush1.bf16.msra.mxu0 %v2010
  %2570 = vmatprep.subr.bf16.mxu0 %v2019
  %2571 = vmatpush1.bf16.msra.mxu0 %v2018
  %2572 = vmatprep.subr.bf16.mxu0 %v2027
  %2573 = vmatpush1.bf16.msra.mxu0 %v2026
  %2574 = vmatprep.subr.bf16.mxu0 %v2035
  %2575 = vmatpush1.bf16.msra.mxu0 %v2034
  %2576 = vmatprep.subr.bf16.mxu0 %v2043
  %2577 = vmatpush1.bf16.msra.mxu0 %v2042
  %2578 = vmatprep.subr.bf16.mxu0 %v2051
  %2579 = vmatpush1.bf16.msra.mxu0 %v2050
  %2580 = vmatprep.mubr.bf16.mxu0 %v490
  %2581 = vmatmul.mubr.bf16.gmra.mrb[0].mxu0 %v489
  %v2582 = vpop.f32.mrb[0].mxu0
  %v2583 = vadd.f32 %v2540, %v2582
  %v2584 = vpop.f32.mrb[0].mxu0
  %v2585 = vadd.f32 %v2542, %v2584
  %v2586 = vpop.f32.mrb[0].mxu0
  %v2587 = vadd.f32 %v2544, %v2586
  %v2588 = vpop.f32.mrb[0].mxu0
  %v2589 = vadd.f32 %v2546, %v2588
  %2590 = vdwg.mxu0
  %2591 = vmatprep.subr.bf16.mxu0 %v2059
  %2592 = vmatpush1.bf16.msra.mxu0 %v2058
  %2593 = vmatprep.subr.bf16.mxu0 0
  %2594 = vmatpush1.bf16.msra.mxu0 0
  %2595 = vmatprep.subr.bf16.mxu0 0
  %2596 = vmatpush1.bf16.msra.mxu0 0
  %2597 = vmatprep.subr.bf16.mxu0 0
  %2598 = vmatpush1.bf16.msra.mxu0 0
  %2599 = vmatprep.subr.bf16.mxu0 0
  %2600 = vmatpush1.bf16.msra.mxu0 0
  %2601 = vmatprep.subr.bf16.mxu0 0
  %2602 = vmatpush1.bf16.msra.mxu0 0
  %2603 = vmatprep.subr.bf16.mxu0 0
  %2604 = vmatpush1.bf16.msra.mxu0 0
  %2605 = vmatprep.subr.bf16.mxu0 0
  %2606 = vmatpush1.bf16.msra.mxu0 0
  %2607 = vmatprep.subr.bf16.mxu0 0
  %2608 = vmatpush1.bf16.msra.mxu0 0
  %2609 = vmatprep.subr.bf16.mxu0 0
  %2610 = vmatpush1.bf16.msra.mxu0 0
  %2611 = vmatprep.subr.bf16.mxu0 0
  %2612 = vmatpush1.bf16.msra.mxu0 0
  %2613 = vmatprep.subr.bf16.mxu0 0
  %2614 = vmatpush1.bf16.msra.mxu0 0
  %2615 = vmatprep.subr.bf16.mxu0 0
  %2616 = vmatpush1.bf16.msra.mxu0 0
  %2617 = vmatprep.subr.bf16.mxu0 0
  %2618 = vmatpush1.bf16.msra.mxu0 0
  %2619 = vmatprep.subr.bf16.mxu0 0
  %2620 = vmatpush1.bf16.msra.mxu0 0
  %2621 = vmatprep.subr.bf16.mxu0 0
  %2622 = vmatpush1.bf16.msra.mxu0 0
  %2623 = vmatprep.mubr.bf16.mxu0 0
  %2624 = vmatmul.mubr.bf16.gmra.mrb[0].mxu0 %v2460
  %v2625 = vpop.f32.mrb[0].mxu0
  %v2626 = vadd.f32 %v2583, %v2625
  %v2627 = vpop.f32.mrb[0].mxu0
  %v2628 = vadd.f32 %v2585, %v2627
  %v2629 = vpop.f32.mrb[0].mxu0
  %v2630 = vadd.f32 %v2587, %v2629
  %v2631 = vpop.f32.mrb[0].mxu0
  %v2632 = vadd.f32 %v2589, %v2631
  %2633 = vdwg.mxu0
  %2634 = vmatprep.subr.bf16.mxu0 %v1677
  %2635 = vmatpush1.bf16.msra.mxu0 %v1676
  %2636 = vmatprep.subr.bf16.mxu0 %v1685
  %2637 = vmatpush1.bf16.msra.mxu0 %v1684
  %2638 = vmatprep.subr.bf16.mxu0 %v1693
  %2639 = vmatpush1.bf16.msra.mxu0 %v1692
  %2640 = vmatprep.subr.bf16.mxu0 %v1701
  %2641 = vmatpush1.bf16.msra.mxu0 %v1700
  %2642 = vmatprep.subr.bf16.mxu0 %v1709
  %2643 = vmatpush1.bf16.msra.mxu0 %v1708
  %2644 = vmatprep.subr.bf16.mxu0 %v1717
  %2645 = vmatpush1.bf16.msra.mxu0 %v1716
  %2646 = vmatprep.subr.bf16.mxu0 %v1725
  %2647 = vmatpush1.bf16.msra.mxu0 %v1724
  %2648 = vmatprep.subr.bf16.mxu0 %v1733
  %2649 = vmatpush1.bf16.msra.mxu0 %v1732
  %2650 = vmatprep.subr.bf16.mxu0 %v1741
  %2651 = vmatpush1.bf16.msra.mxu0 %v1740
  %2652 = vmatprep.subr.bf16.mxu0 %v1749
  %2653 = vmatpush1.bf16.msra.mxu0 %v1748
  %2654 = vmatprep.subr.bf16.mxu0 %v1757
  %2655 = vmatpush1.bf16.msra.mxu0 %v1756
  %2656 = vmatprep.subr.bf16.mxu0 %v1765
  %2657 = vmatpush1.bf16.msra.mxu0 %v1764
  %2658 = vmatprep.subr.bf16.mxu0 %v1773
  %2659 = vmatpush1.bf16.msra.mxu0 %v1772
  %2660 = vmatprep.subr.bf16.mxu0 %v1781
  %2661 = vmatpush1.bf16.msra.mxu0 %v1780
  %2662 = vmatprep.subr.bf16.mxu0 %v1789
  %2663 = vmatpush1.bf16.msra.mxu0 %v1788
  %2664 = vmatprep.subr.bf16.mxu0 %v1797
  %2665 = vmatpush1.bf16.msra.mxu0 %v1796
  %2666 = vmatprep.mubr.bf16.mxu0 %v486
  %2667 = vmatmul.mubr.bf16.gmra.mrb[0].mxu0 %v485
  %v2668 = vpop.f32.mrb[0].mxu0
  %v2669 = vadd.f32 %v434, %v2668
  %v2670 = vpop.f32.mrb[0].mxu0
  %v2671 = vadd.f32 %v438, %v2670
  %v2672 = vpop.f32.mrb[0].mxu0
  %v2673 = vadd.f32 %v434, %v2672
  %v2674 = vpop.f32.mrb[0].mxu0
  %v2675 = vadd.f32 %v438, %v2674
  %2676 = vdwg.mxu0
  %2677 = vmatprep.subr.bf16.mxu0 %v1805
  %2678 = vmatpush1.bf16.msra.mxu0 %v1804
  %2679 = vmatprep.subr.bf16.mxu0 %v1813
  %2680 = vmatpush1.bf16.msra.mxu0 %v1812
  %2681 = vmatprep.subr.bf16.mxu0 %v1821
  %2682 = vmatpush1.bf16.msra.mxu0 %v1820
  %2683 = vmatprep.subr.bf16.mxu0 %v1829
  %2684 = vmatpush1.bf16.msra.mxu0 %v1828
  %2685 = vmatprep.subr.bf16.mxu0 %v1837
  %2686 = vmatpush1.bf16.msra.mxu0 %v1836
  %2687 = vmatprep.subr.bf16.mxu0 %v1845
  %2688 = vmatpush1.bf16.msra.mxu0 %v1844
  %2689 = vmatprep.subr.bf16.mxu0 %v1853
  %2690 = vmatpush1.bf16.msra.mxu0 %v1852
  %2691 = vmatprep.subr.bf16.mxu0 %v1861
  %2692 = vmatpush1.bf16.msra.mxu0 %v1860
  %2693 = vmatprep.subr.bf16.mxu0 %v1869
  %2694 = vmatpush1.bf16.msra.mxu0 %v1868
  %2695 = vmatprep.subr.bf16.mxu0 %v1877
  %2696 = vmatpush1.bf16.msra.mxu0 %v1876
  %2697 = vmatprep.subr.bf16.mxu0 %v1885
  %2698 = vmatpush1.bf16.msra.mxu0 %v1884
  %2699 = vmatprep.subr.bf16.mxu0 %v1893
  %2700 = vmatpush1.bf16.msra.mxu0 %v1892
  %2701 = vmatprep.subr.bf16.mxu0 %v1901
  %2702 = vmatpush1.bf16.msra.mxu0 %v1900
  %2703 = vmatprep.subr.bf16.mxu0 %v1909
  %2704 = vmatpush1.bf16.msra.mxu0 %v1908
  %2705 = vmatprep.subr.bf16.mxu0 %v1917
  %2706 = vmatpush1.bf16.msra.mxu0 %v1916
  %2707 = vmatprep.subr.bf16.mxu0 %v1925
  %2708 = vmatpush1.bf16.msra.mxu0 %v1924
  %2709 = vmatprep.mubr.bf16.mxu0 %v488
  %2710 = vmatmul.mubr.bf16.gmra.mrb[0].mxu0 %v487
  %v2711 = vpop.f32.mrb[0].mxu0
  %v2712 = vadd.f32 %v2669, %v2711
  %v2713 = vpop.f32.mrb[0].mxu0
  %v2714 = vadd.f32 %v2671, %v2713
  %v2715 = vpop.f32.mrb[0].mxu0
  %v2716 = vadd.f32 %v2673, %v2715
  %v2717 = vpop.f32.mrb[0].mxu0
  %v2718 = vadd.f32 %v2675, %v2717
  %2719 = vdwg.mxu0
  %2720 = vmatprep.subr.bf16.mxu0 %v1933
  %2721 = vmatpush1.bf16.msra.mxu0 %v1932
  %2722 = vmatprep.subr.bf16.mxu0 %v1941
  %2723 = vmatpush1.bf16.msra.mxu0 %v1940
  %2724 = vmatprep.subr.bf16.mxu0 %v1949
  %2725 = vmatpush1.bf16.msra.mxu0 %v1948
  %2726 = vmatprep.subr.bf16.mxu0 %v1957
  %2727 = vmatpush1.bf16.msra.mxu0 %v1956
  %2728 = vmatprep.subr.bf16.mxu0 %v1965
  %2729 = vmatpush1.bf16.msra.mxu0 %v1964
  %2730 = vmatprep.subr.bf16.mxu0 %v1973
  %2731 = vmatpush1.bf16.msra.mxu0 %v1972
  %2732 = vmatprep.subr.bf16.mxu0 %v1981
  %2733 = vmatpush1.bf16.msra.mxu0 %v1980
  %2734 = vmatprep.subr.bf16.mxu0 %v1989
  %2735 = vmatpush1.bf16.msra.mxu0 %v1988
  %2736 = vmatprep.subr.bf16.mxu0 %v1997
  %2737 = vmatpush1.bf16.msra.mxu0 %v1996
  %2738 = vmatprep.subr.bf16.mxu0 %v2005
  %2739 = vmatpush1.bf16.msra.mxu0 %v2004
  %2740 = vmatprep.subr.bf16.mxu0 %v2013
  %2741 = vmatpush1.bf16.msra.mxu0 %v2012
  %2742 = vmatprep.subr.bf16.mxu0 %v2021
  %2743 = vmatpush1.bf16.msra.mxu0 %v2020
  %2744 = vmatprep.subr.bf16.mxu0 %v2029
  %2745 = vmatpush1.bf16.msra.mxu0 %v2028
  %2746 = vmatprep.subr.bf16.mxu0 %v2037
  %2747 = vmatpush1.bf16.msra.mxu0 %v2036
  %2748 = vmatprep.subr.bf16.mxu0 %v2045
  %2749 = vmatpush1.bf16.msra.mxu0 %v2044
  %2750 = vmatprep.subr.bf16.mxu0 %v2053
  %2751 = vmatpush1.bf16.msra.mxu0 %v2052
  %2752 = vmatprep.mubr.bf16.mxu0 %v490
  %2753 = vmatmul.mubr.bf16.gmra.mrb[0].mxu0 %v489
  %v2754 = vpop.f32.mrb[0].mxu0
  %v2755 = vadd.f32 %v2712, %v2754
  %v2756 = vpop.f32.mrb[0].mxu0
  %v2757 = vadd.f32 %v2714, %v2756
  %v2758 = vpop.f32.mrb[0].mxu0
  %v2759 = vadd.f32 %v2716, %v2758
  %v2760 = vpop.f32.mrb[0].mxu0
  %v2761 = vadd.f32 %v2718, %v2760
  %2762 = vdwg.mxu0
  %2763 = vmatprep.subr.bf16.mxu0 %v2061
  %2764 = vmatpush1.bf16.msra.mxu0 %v2060
  %2765 = vmatprep.subr.bf16.mxu0 0
  %2766 = vmatpush1.bf16.msra.mxu0 0
  %2767 = vmatprep.subr.bf16.mxu0 0
  %2768 = vmatpush1.bf16.msra.mxu0 0
  %2769 = vmatprep.subr.bf16.mxu0 0
  %2770 = vmatpush1.bf16.msra.mxu0 0
  %2771 = vmatprep.subr.bf16.mxu0 0
  %2772 = vmatpush1.bf16.msra.mxu0 0
  %2773 = vmatprep.subr.bf16.mxu0 0
  %2774 = vmatpush1.bf16.msra.mxu0 0
  %2775 = vmatprep.subr.bf16.mxu0 0
  %2776 = vmatpush1.bf16.msra.mxu0 0
  %2777 = vmatprep.subr.bf16.mxu0 0
  %2778 = vmatpush1.bf16.msra.mxu0 0
  %2779 = vmatprep.subr.bf16.mxu0 0
  %2780 = vmatpush1.bf16.msra.mxu0 0
  %2781 = vmatprep.subr.bf16.mxu0 0
  %2782 = vmatpush1.bf16.msra.mxu0 0
  %2783 = vmatprep.subr.bf16.mxu0 0
  %2784 = vmatpush1.bf16.msra.mxu0 0
  %2785 = vmatprep.subr.bf16.mxu0 0
  %2786 = vmatpush1.bf16.msra.mxu0 0
  %2787 = vmatprep.subr.bf16.mxu0 0
  %2788 = vmatpush1.bf16.msra.mxu0 0
  %2789 = vmatprep.subr.bf16.mxu0 0
  %2790 = vmatpush1.bf16.msra.mxu0 0
  %2791 = vmatprep.subr.bf16.mxu0 0
  %2792 = vmatpush1.bf16.msra.mxu0 0
  %2793 = vmatprep.subr.bf16.mxu0 0
  %2794 = vmatpush1.bf16.msra.mxu0 0
  %2795 = vmatprep.mubr.bf16.mxu0 0
  %2796 = vmatmul.mubr.bf16.gmra.mrb[0].mxu0 %v2460
  %v2797 = vpop.f32.mrb[0].mxu0
  %v2798 = vadd.f32 %v2755, %v2797
  %v2799 = vpop.f32.mrb[0].mxu0
  %v2800 = vadd.f32 %v2757, %v2799
  %v2801 = vpop.f32.mrb[0].mxu0
  %v2802 = vadd.f32 %v2759, %v2801
  %v2803 = vpop.f32.mrb[0].mxu0
  %v2804 = vadd.f32 %v2761, %v2803
  %2805 = vdwg.mxu0
  %2806 = vmatprep.subr.bf16.mxu0 %v1679
  %2807 = vmatpush1.bf16.msra.mxu0 %v1678
  %2808 = vmatprep.subr.bf16.mxu0 %v1687
  %2809 = vmatpush1.bf16.msra.mxu0 %v1686
  %2810 = vmatprep.subr.bf16.mxu0 %v1695
  %2811 = vmatpush1.bf16.msra.mxu0 %v1694
  %2812 = vmatprep.subr.bf16.mxu0 %v1703
  %2813 = vmatpush1.bf16.msra.mxu0 %v1702
  %2814 = vmatprep.subr.bf16.mxu0 %v1711
  %2815 = vmatpush1.bf16.msra.mxu0 %v1710
  %2816 = vmatprep.subr.bf16.mxu0 %v1719
  %2817 = vmatpush1.bf16.msra.mxu0 %v1718
  %2818 = vmatprep.subr.bf16.mxu0 %v1727
  %2819 = vmatpush1.bf16.msra.mxu0 %v1726
  %2820 = vmatprep.subr.bf16.mxu0 %v1735
  %2821 = vmatpush1.bf16.msra.mxu0 %v1734
  %2822 = vmatprep.subr.bf16.mxu0 %v1743
  %2823 = vmatpush1.bf16.msra.mxu0 %v1742
  %2824 = vmatprep.subr.bf16.mxu0 %v1751
  %2825 = vmatpush1.bf16.msra.mxu0 %v1750
  %2826 = vmatprep.subr.bf16.mxu0 %v1759
  %2827 = vmatpush1.bf16.msra.mxu0 %v1758
  %2828 = vmatprep.subr.bf16.mxu0 %v1767
  %2829 = vmatpush1.bf16.msra.mxu0 %v1766
  %2830 = vmatprep.subr.bf16.mxu0 %v1775
  %2831 = vmatpush1.bf16.msra.mxu0 %v1774
  %2832 = vmatprep.subr.bf16.mxu0 %v1783
  %2833 = vmatpush1.bf16.msra.mxu0 %v1782
  %2834 = vmatprep.subr.bf16.mxu0 %v1791
  %2835 = vmatpush1.bf16.msra.mxu0 %v1790
  %2836 = vmatprep.subr.bf16.mxu0 %v1799
  %2837 = vmatpush1.bf16.msra.mxu0 %v1798
  %2838 = vmatprep.mubr.bf16.mxu0 %v486
  %2839 = vmatmul.mubr.bf16.gmra.mrb[0].mxu0 %v485
  %v2840 = vpop.f32.mrb[0].mxu0
  %v2841 = vadd.f32 %v442, %v2840
  %v2842 = vpop.f32.mrb[0].mxu0
  %v2843 = vadd.f32 %v446, %v2842
  %v2844 = vpop.f32.mrb[0].mxu0
  %v2845 = vadd.f32 %v442, %v2844
  %v2846 = vpop.f32.mrb[0].mxu0
  %v2847 = vadd.f32 %v446, %v2846
  %2848 = vdwg.mxu0
  %2849 = vmatprep.subr.bf16.mxu0 %v1807
  %2850 = vmatpush1.bf16.msra.mxu0 %v1806
  %2851 = vmatprep.subr.bf16.mxu0 %v1815
  %2852 = vmatpush1.bf16.msra.mxu0 %v1814
  %2853 = vmatprep.subr.bf16.mxu0 %v1823
  %2854 = vmatpush1.bf16.msra.mxu0 %v1822
  %2855 = vmatprep.subr.bf16.mxu0 %v1831
  %2856 = vmatpush1.bf16.msra.mxu0 %v1830
  %2857 = vmatprep.subr.bf16.mxu0 %v1839
  %2858 = vmatpush1.bf16.msra.mxu0 %v1838
  %2859 = vmatprep.subr.bf16.mxu0 %v1847
  %2860 = vmatpush1.bf16.msra.mxu0 %v1846
  %2861 = vmatprep.subr.bf16.mxu0 %v1855
  %2862 = vmatpush1.bf16.msra.mxu0 %v1854
  %2863 = vmatprep.subr.bf16.mxu0 %v1863
  %2864 = vmatpush1.bf16.msra.mxu0 %v1862
  %2865 = vmatprep.subr.bf16.mxu0 %v1871
  %2866 = vmatpush1.bf16.msra.mxu0 %v1870
  %2867 = vmatprep.subr.bf16.mxu0 %v1879
  %2868 = vmatpush1.bf16.msra.mxu0 %v1878
  %2869 = vmatprep.subr.bf16.mxu0 %v1887
  %2870 = vmatpush1.bf16.msra.mxu0 %v1886
  %2871 = vmatprep.subr.bf16.mxu0 %v1895
  %2872 = vmatpush1.bf16.msra.mxu0 %v1894
  %2873 = vmatprep.subr.bf16.mxu0 %v1903
  %2874 = vmatpush1.bf16.msra.mxu0 %v1902
  %2875 = vmatprep.subr.bf16.mxu0 %v1911
  %2876 = vmatpush1.bf16.msra.mxu0 %v1910
  %2877 = vmatprep.subr.bf16.mxu0 %v1919
  %2878 = vmatpush1.bf16.msra.mxu0 %v1918
  %2879 = vmatprep.subr.bf16.mxu0 %v1927
  %2880 = vmatpush1.bf16.msra.mxu0 %v1926
  %2881 = vmatprep.mubr.bf16.mxu0 %v488
  %2882 = vmatmul.mubr.bf16.gmra.mrb[0].mxu0 %v487
  %v2883 = vpop.f32.mrb[0].mxu0
  %v2884 = vadd.f32 %v2841, %v2883
  %v2885 = vpop.f32.mrb[0].mxu0
  %v2886 = vadd.f32 %v2843, %v2885
  %v2887 = vpop.f32.mrb[0].mxu0
  %v2888 = vadd.f32 %v2845, %v2887
  %v2889 = vpop.f32.mrb[0].mxu0
  %v2890 = vadd.f32 %v2847, %v2889
  %2891 = vdwg.mxu0
  %2892 = vmatprep.subr.bf16.mxu0 %v1935
  %2893 = vmatpush1.bf16.msra.mxu0 %v1934
  %2894 = vmatprep.subr.bf16.mxu0 %v1943
  %2895 = vmatpush1.bf16.msra.mxu0 %v1942
  %2896 = vmatprep.subr.bf16.mxu0 %v1951
  %2897 = vmatpush1.bf16.msra.mxu0 %v1950
  %2898 = vmatprep.subr.bf16.mxu0 %v1959
  %2899 = vmatpush1.bf16.msra.mxu0 %v1958
  %2900 = vmatprep.subr.bf16.mxu0 %v1967
  %2901 = vmatpush1.bf16.msra.mxu0 %v1966
  %2902 = vmatprep.subr.bf16.mxu0 %v1975
  %2903 = vmatpush1.bf16.msra.mxu0 %v1974
  %2904 = vmatprep.subr.bf16.mxu0 %v1983
  %2905 = vmatpush1.bf16.msra.mxu0 %v1982
  %2906 = vmatprep.subr.bf16.mxu0 %v1991
  %2907 = vmatpush1.bf16.msra.mxu0 %v1990
  %2908 = vmatprep.subr.bf16.mxu0 %v1999
  %2909 = vmatpush1.bf16.msra.mxu0 %v1998
  %2910 = vmatprep.subr.bf16.mxu0 %v2007
  %2911 = vmatpush1.bf16.msra.mxu0 %v2006
  %2912 = vmatprep.subr.bf16.mxu0 %v2015
  %2913 = vmatpush1.bf16.msra.mxu0 %v2014
  %2914 = vmatprep.subr.bf16.mxu0 %v2023
  %2915 = vmatpush1.bf16.msra.mxu0 %v2022
  %2916 = vmatprep.subr.bf16.mxu0 %v2031
  %2917 = vmatpush1.bf16.msra.mxu0 %v2030
  %2918 = vmatprep.subr.bf16.mxu0 %v2039
  %2919 = vmatpush1.bf16.msra.mxu0 %v2038
  %2920 = vmatprep.subr.bf16.mxu0 %v2047
  %2921 = vmatpush1.bf16.msra.mxu0 %v2046
  %2922 = vmatprep.subr.bf16.mxu0 %v2055
  %2923 = vmatpush1.bf16.msra.mxu0 %v2054
  %2924 = vmatprep.mubr.bf16.mxu0 %v490
  %2925 = vmatmul.mubr.bf16.gmra.mrb[0].mxu0 %v489
  %v2926 = vpop.f32.mrb[0].mxu0
  %v2927 = vadd.f32 %v2884, %v2926
  %v2928 = vpop.f32.mrb[0].mxu0
  %v2929 = vadd.f32 %v2886, %v2928
  %v2930 = vpop.f32.mrb[0].mxu0
  %v2931 = vadd.f32 %v2888, %v2930
  %v2932 = vpop.f32.mrb[0].mxu0
  %v2933 = vadd.f32 %v2890, %v2932
  %2934 = vdwg.mxu0
  %2935 = vmatprep.subr.bf16.mxu0 %v2063
  %2936 = vmatpush1.bf16.msra.mxu0 %v2062
  %2937 = vmatprep.subr.bf16.mxu0 0
  %2938 = vmatpush1.bf16.msra.mxu0 0
  %2939 = vmatprep.subr.bf16.mxu0 0
  %2940 = vmatpush1.bf16.msra.mxu0 0
  %2941 = vmatprep.subr.bf16.mxu0 0
  %2942 = vmatpush1.bf16.msra.mxu0 0
  %2943 = vmatprep.subr.bf16.mxu0 0
  %2944 = vmatpush1.bf16.msra.mxu0 0
  %2945 = vmatprep.subr.bf16.mxu0 0
  %2946 = vmatpush1.bf16.msra.mxu0 0
  %2947 = vmatprep.subr.bf16.mxu0 0
  %2948 = vmatpush1.bf16.msra.mxu0 0
  %2949 = vmatprep.subr.bf16.mxu0 0
  %2950 = vmatpush1.bf16.msra.mxu0 0
  %2951 = vmatprep.subr.bf16.mxu0 0
  %2952 = vmatpush1.bf16.msra.mxu0 0
  %2953 = vmatprep.subr.bf16.mxu0 0
  %2954 = vmatpush1.bf16.msra.mxu0 0
  %2955 = vmatprep.subr.bf16.mxu0 0
  %2956 = vmatpush1.bf16.msra.mxu0 0
  %2957 = vmatprep.subr.bf16.mxu0 0
  %2958 = vmatpush1.bf16.msra.mxu0 0
  %2959 = vmatprep.subr.bf16.mxu0 0
  %2960 = vmatpush1.bf16.msra.mxu0 0
  %2961 = vmatprep.subr.bf16.mxu0 0
  %2962 = vmatpush1.bf16.msra.mxu0 0
  %2963 = vmatprep.subr.bf16.mxu0 0
  %2964 = vmatpush1.bf16.msra.mxu0 0
  %2965 = vmatprep.subr.bf16.mxu0 0
  %2966 = vmatpush1.bf16.msra.mxu0 0
  %2967 = vmatprep.mubr.bf16.mxu0 0
  %2968 = vmatmul.mubr.bf16.gmra.mrb[0].mxu0 %v2460
  %v2969 = vpop.f32.mrb[0].mxu0
  %v2970 = vadd.f32 %v2927, %v2969
  %v2971 = vpop.f32.mrb[0].mxu0
  %v2972 = vadd.f32 %v2929, %v2971
  %v2973 = vpop.f32.mrb[0].mxu0
  %v2974 = vadd.f32 %v2931, %v2973
  %v2975 = vpop.f32.mrb[0].mxu0
  %v2976 = vadd.f32 %v2933, %v2975
  %2977 = vdwg.mxu0
  %2978 = vmatprep.subr.bf16.mxu0 %v1681
  %2979 = vmatpush1.bf16.msra.mxu0 %v1680
  %2980 = vmatprep.subr.bf16.mxu0 %v1689
  %2981 = vmatpush1.bf16.msra.mxu0 %v1688
  %2982 = vmatprep.subr.bf16.mxu0 %v1697
  %2983 = vmatpush1.bf16.msra.mxu0 %v1696
  %2984 = vmatprep.subr.bf16.mxu0 %v1705
  %2985 = vmatpush1.bf16.msra.mxu0 %v1704
  %2986 = vmatprep.subr.bf16.mxu0 %v1713
  %2987 = vmatpush1.bf16.msra.mxu0 %v1712
  %2988 = vmatprep.subr.bf16.mxu0 %v1721
  %2989 = vmatpush1.bf16.msra.mxu0 %v1720
  %2990 = vmatprep.subr.bf16.mxu0 %v1729
  %2991 = vmatpush1.bf16.msra.mxu0 %v1728
  %2992 = vmatprep.subr.bf16.mxu0 %v1737
  %2993 = vmatpush1.bf16.msra.mxu0 %v1736
  %2994 = vmatprep.subr.bf16.mxu0 %v1745
  %2995 = vmatpush1.bf16.msra.mxu0 %v1744
  %2996 = vmatprep.subr.bf16.mxu0 %v1753
  %2997 = vmatpush1.bf16.msra.mxu0 %v1752
  %2998 = vmatprep.subr.bf16.mxu0 %v1761
  %2999 = vmatpush1.bf16.msra.mxu0 %v1760
  %3000 = vmatprep.subr.bf16.mxu0 %v1769
  %3001 = vmatpush1.bf16.msra.mxu0 %v1768
  %3002 = vmatprep.subr.bf16.mxu0 %v1777
  %3003 = vmatpush1.bf16.msra.mxu0 %v1776
  %3004 = vmatprep.subr.bf16.mxu0 %v1785
  %3005 = vmatpush1.bf16.msra.mxu0 %v1784
  %3006 = vmatprep.subr.bf16.mxu0 %v1793
  %3007 = vmatpush1.bf16.msra.mxu0 %v1792
  %3008 = vmatprep.subr.bf16.mxu0 %v1801
  %3009 = vmatpush1.bf16.msra.mxu0 %v1800
  %3010 = vmatprep.mubr.bf16.mxu0 %v486
  %3011 = vmatmul.mubr.bf16.gmra.mrb[0].mxu0 %v485
  %v3012 = vpop.f32.mrb[0].mxu0
  %v3013 = vadd.f32 %v450, %v3012
  %v3014 = vpop.f32.mrb[0].mxu0
  %v3015 = vadd.f32 %v454, %v3014
  %v3016 = vpop.f32.mrb[0].mxu0
  %v3017 = vadd.f32 %v450, %v3016
  %v3018 = vpop.f32.mrb[0].mxu0
  %v3019 = vadd.f32 %v454, %v3018
  %3020 = vdwg.mxu0
  %3021 = vmatprep.subr.bf16.mxu0 %v1809
  %3022 = vmatpush1.bf16.msra.mxu0 %v1808
  %3023 = vmatprep.subr.bf16.mxu0 %v1817
  %3024 = vmatpush1.bf16.msra.mxu0 %v1816
  %3025 = vmatprep.subr.bf16.mxu0 %v1825
  %3026 = vmatpush1.bf16.msra.mxu0 %v1824
  %3027 = vmatprep.subr.bf16.mxu0 %v1833
  %3028 = vmatpush1.bf16.msra.mxu0 %v1832
  %3029 = vmatprep.subr.bf16.mxu0 %v1841
  %3030 = vmatpush1.bf16.msra.mxu0 %v1840
  %3031 = vmatprep.subr.bf16.mxu0 %v1849
  %3032 = vmatpush1.bf16.msra.mxu0 %v1848
  %3033 = vmatprep.subr.bf16.mxu0 %v1857
  %3034 = vmatpush1.bf16.msra.mxu0 %v1856
  %3035 = vmatprep.subr.bf16.mxu0 %v1865
  %3036 = vmatpush1.bf16.msra.mxu0 %v1864
  %3037 = vmatprep.subr.bf16.mxu0 %v1873
  %3038 = vmatpush1.bf16.msra.mxu0 %v1872
  %3039 = vmatprep.subr.bf16.mxu0 %v1881
  %3040 = vmatpush1.bf16.msra.mxu0 %v1880
  %3041 = vmatprep.subr.bf16.mxu0 %v1889
  %3042 = vmatpush1.bf16.msra.mxu0 %v1888
  %3043 = vmatprep.subr.bf16.mxu0 %v1897
  %3044 = vmatpush1.bf16.msra.mxu0 %v1896
  %3045 = vmatprep.subr.bf16.mxu0 %v1905
  %3046 = vmatpush1.bf16.msra.mxu0 %v1904
  %3047 = vmatprep.subr.bf16.mxu0 %v1913
  %3048 = vmatpush1.bf16.msra.mxu0 %v1912
  %3049 = vmatprep.subr.bf16.mxu0 %v1921
  %3050 = vmatpush1.bf16.msra.mxu0 %v1920
  %3051 = vmatprep.subr.bf16.mxu0 %v1929
  %3052 = vmatpush1.bf16.msra.mxu0 %v1928
  %3053 = vmatprep.mubr.bf16.mxu0 %v488
  %3054 = vmatmul.mubr.bf16.gmra.mrb[0].mxu0 %v487
  %v3055 = vpop.f32.mrb[0].mxu0
  %v3056 = vadd.f32 %v3013, %v3055
  %v3057 = vpop.f32.mrb[0].mxu0
  %v3058 = vadd.f32 %v3015, %v3057
  %v3059 = vpop.f32.mrb[0].mxu0
  %v3060 = vadd.f32 %v3017, %v3059
  %v3061 = vpop.f32.mrb[0].mxu0
  %v3062 = vadd.f32 %v3019, %v3061
  %3063 = vdwg.mxu0
  %3064 = vmatprep.subr.bf16.mxu0 %v1937
  %3065 = vmatpush1.bf16.msra.mxu0 %v1936
  %3066 = vmatprep.subr.bf16.mxu0 %v1945
  %3067 = vmatpush1.bf16.msra.mxu0 %v1944
  %3068 = vmatprep.subr.bf16.mxu0 %v1953
  %3069 = vmatpush1.bf16.msra.mxu0 %v1952
  %3070 = vmatprep.subr.bf16.mxu0 %v1961
  %3071 = vmatpush1.bf16.msra.mxu0 %v1960
  %3072 = vmatprep.subr.bf16.mxu0 %v1969
  %3073 = vmatpush1.bf16.msra.mxu0 %v1968
  %3074 = vmatprep.subr.bf16.mxu0 %v1977
  %3075 = vmatpush1.bf16.msra.mxu0 %v1976
  %3076 = vmatprep.subr.bf16.mxu0 %v1985
  %3077 = vmatpush1.bf16.msra.mxu0 %v1984
  %3078 = vmatprep.subr.bf16.mxu0 %v1993
  %3079 = vmatpush1.bf16.msra.mxu0 %v1992
  %3080 = vmatprep.subr.bf16.mxu0 %v2001
  %3081 = vmatpush1.bf16.msra.mxu0 %v2000
  %3082 = vmatprep.subr.bf16.mxu0 %v2009
  %3083 = vmatpush1.bf16.msra.mxu0 %v2008
  %3084 = vmatprep.subr.bf16.mxu0 %v2017
  %3085 = vmatpush1.bf16.msra.mxu0 %v2016
  %3086 = vmatprep.subr.bf16.mxu0 %v2025
  %3087 = vmatpush1.bf16.msra.mxu0 %v2024
  %3088 = vmatprep.subr.bf16.mxu0 %v2033
  %3089 = vmatpush1.bf16.msra.mxu0 %v2032
  %3090 = vmatprep.subr.bf16.mxu0 %v2041
  %3091 = vmatpush1.bf16.msra.mxu0 %v2040
  %3092 = vmatprep.subr.bf16.mxu0 %v2049
  %3093 = vmatpush1.bf16.msra.mxu0 %v2048
  %3094 = vmatprep.subr.bf16.mxu0 %v2057
  %3095 = vmatpush1.bf16.msra.mxu0 %v2056
  %3096 = vmatprep.mubr.bf16.mxu0 %v490
  %3097 = vmatmul.mubr.bf16.gmra.mrb[0].mxu0 %v489
  %v3098 = vpop.f32.mrb[0].mxu0
  %v3099 = vadd.f32 %v3056, %v3098
  %v3100 = vpop.f32.mrb[0].mxu0
  %v3101 = vadd.f32 %v3058, %v3100
  %v3102 = vpop.f32.mrb[0].mxu0
  %v3103 = vadd.f32 %v3060, %v3102
  %v3104 = vpop.f32.mrb[0].mxu0
  %v3105 = vadd.f32 %v3062, %v3104
  %3106 = vdwg.mxu0
  %3107 = vmatprep.subr.bf16.mxu0 %v2065
  %3108 = vmatpush1.bf16.msra.mxu0 %v2064
  %3109 = vmatprep.subr.bf16.mxu0 0
  %3110 = vmatpush1.bf16.msra.mxu0 0
  %3111 = vmatprep.subr.bf16.mxu0 0
  %3112 = vmatpush1.bf16.msra.mxu0 0
  %3113 = vmatprep.subr.bf16.mxu0 0
  %3114 = vmatpush1.bf16.msra.mxu0 0
  %3115 = vmatprep.subr.bf16.mxu0 0
  %3116 = vmatpush1.bf16.msra.mxu0 0
  %3117 = vmatprep.subr.bf16.mxu0 0
  %3118 = vmatpush1.bf16.msra.mxu0 0
  %3119 = vmatprep.subr.bf16.mxu0 0
  %3120 = vmatpush1.bf16.msra.mxu0 0
  %3121 = vmatprep.subr.bf16.mxu0 0
  %3122 = vmatpush1.bf16.msra.mxu0 0
  %3123 = vmatprep.subr.bf16.mxu0 0
  %3124 = vmatpush1.bf16.msra.mxu0 0
  %3125 = vmatprep.subr.bf16.mxu0 0
  %3126 = vmatpush1.bf16.msra.mxu0 0
  %3127 = vmatprep.subr.bf16.mxu0 0
  %3128 = vmatpush1.bf16.msra.mxu0 0
  %3129 = vmatprep.subr.bf16.mxu0 0
  %3130 = vmatpush1.bf16.msra.mxu0 0
  %3131 = vmatprep.subr.bf16.mxu0 0
  %3132 = vmatpush1.bf16.msra.mxu0 0
  %3133 = vmatprep.subr.bf16.mxu0 0
  %3134 = vmatpush1.bf16.msra.mxu0 0
  %3135 = vmatprep.subr.bf16.mxu0 0
  %3136 = vmatpush1.bf16.msra.mxu0 0
  %3137 = vmatprep.subr.bf16.mxu0 0
  %3138 = vmatpush1.bf16.msra.mxu0 0
  %3139 = vmatprep.mubr.bf16.mxu0 0
  %3140 = vmatmul.mubr.bf16.gmra.mrb[0].mxu0 %v2460
  %v3141 = vpop.f32.mrb[0].mxu0
  %v3142 = vadd.f32 %v3099, %v3141
  %v3143 = vpop.f32.mrb[0].mxu0
  %v3144 = vadd.f32 %v3101, %v3143
  %v3145 = vpop.f32.mrb[0].mxu0
  %v3146 = vadd.f32 %v3103, %v3145
  %v3147 = vpop.f32.mrb[0].mxu0
  %v3148 = vadd.f32 %v3105, %v3147
  %3149 = vdwg.mxu0
  %v3150 = vmax.f32 %v2626, 0.0
  %v3151 = vmax.f32 %v2628, 0.0
  %v3152 = vmax.f32 %v2798, 0.0
  %v3153 = vmax.f32 %v2800, 0.0
  %v3154 = vmax.f32 %v2970, 0.0
  %v3155 = vmax.f32 %v2972, 0.0
  %v3156 = vmax.f32 %v3142, 0.0
  %v3157 = vmax.f32 %v3144, 0.0
  %v3158 = vmax.f32 %v2630, 0.0
  %v3159 = vmax.f32 %v2632, 0.0
  %v3160 = vmax.f32 %v2802, 0.0
  %v3161 = vmax.f32 %v2804, 0.0
  %v3162 = vmax.f32 %v2974, 0.0
  %v3163 = vmax.f32 %v2976, 0.0
  %v3164 = vmax.f32 %v3146, 0.0
  %v3165 = vmax.f32 %v3148, 0.0
  %v3166 = vpack.c.bf16 %v3158, %v3150
  %v3167 = vpack.c.bf16 %v3159, %v3151
  %v3168 = vpack.c.bf16 %v3160, %v3152
  %v3169 = vpack.c.bf16 %v3161, %v3153
  %v3170 = vpack.c.bf16 %v3162, %v3154
  %v3171 = vpack.c.bf16 %v3163, %v3155
  %v3172 = vpack.c.bf16 %v3164, %v3156
  %v3173 = vpack.c.bf16 %v3165, %v3157
  %v3174 = vld [vmem:[%s3] sm:$0xf]
  %v3175 = vld [vmem:[%s3 + $0x4] sm:$0xf]
  %v3176 = vld [vmem:[%s3 + $0x8] sm:$0xf]
  %v3177 = vld [vmem:[%s3 + $0xc] sm:$0xf]
  %v3178 = vld [vmem:[%s3 + $0x10] sm:$0xf]
  %v3179 = vld [vmem:[%s3 + $0x14] sm:$0xf]
  %v3180 = vld [vmem:[%s3 + $0x18] sm:$0xf]
  %v3181 = vld [vmem:[%s3 + $0x1c] sm:$0xf]
  %v3182 = vld [vmem:[%s3 + $0x20] sm:$0xf]
  %v3183 = vld [vmem:[%s3 + $0x24] sm:$0xf]
  %v3184 = vld [vmem:[%s3 + $0x28] sm:$0xf]
  %v3185 = vld [vmem:[%s3 + $0x2c] sm:$0xf]
  %v3186 = vld [vmem:[%s3 + $0x30] sm:$0xf]
  %v3187 = vld [vmem:[%s3 + $0x34] sm:$0xf]
  %v3188 = vld [vmem:[%s3 + $0x38] sm:$0xf]
  %v3189 = vld [vmem:[%s3 + $0x3c] sm:$0xf]
  %v3190 = vld [vmem:[%s3 + $0x40] sm:$0xf]
  %v3191 = vld [vmem:[%s3 + $0x44] sm:$0xf]
  %v3192 = vld [vmem:[%s3 + $0x48] sm:$0xf]
  %v3193 = vld [vmem:[%s3 + $0x4c] sm:$0xf]
  %v3194 = vld [vmem:[%s3 + $0x50] sm:$0xf]
  %v3195 = vld [vmem:[%s3 + $0x54] sm:$0xf]
  %v3196 = vld [vmem:[%s3 + $0x58] sm:$0xf]
  %v3197 = vld [vmem:[%s3 + $0x5c] sm:$0xf]
  %v3198 = vld [vmem:[%s3 + $0x60] sm:$0xf]
  %v3199 = vld [vmem:[%s3 + $0x64] sm:$0xf]
  %v3200 = vld [vmem:[%s3 + $0x68] sm:$0xf]
  %v3201 = vld [vmem:[%s3 + $0x6c] sm:$0xf]
  %v3202 = vld [vmem:[%s3 + $0x70] sm:$0xf]
  %v3203 = vld [vmem:[%s3 + $0x74] sm:$0xf]
  %v3204 = vld [vmem:[%s3 + $0x78] sm:$0xf]
  %v3205 = vld [vmem:[%s3 + $0x7c] sm:$0xf]
  %v3206 = vld [vmem:[%s3 + $0x80] sm:$0xf]
  %v3207 = vld [vmem:[%s3 + $0x84] sm:$0xf]
  %v3208 = vld [vmem:[%s3 + $0x88] sm:$0xf]
  %v3209 = vld [vmem:[%s3 + $0x8c] sm:$0xf]
  %v3210 = vld [vmem:[%s3 + $0x90] sm:$0xf]
  %v3211 = vld [vmem:[%s3 + $0x94] sm:$0xf]
  %v3212 = vld [vmem:[%s3 + $0x98] sm:$0xf]
  %v3213 = vld [vmem:[%s3 + $0x9c] sm:$0xf]
  %v3214 = vld [vmem:[%s3 + $0xa0] sm:$0xf]
  %v3215 = vld [vmem:[%s3 + $0xa4] sm:$0xf]
  %v3216 = vld [vmem:[%s3 + $0xa8] sm:$0xf]
  %v3217 = vld [vmem:[%s3 + $0xac] sm:$0xf]
  %v3218 = vld [vmem:[%s3 + $0xb0] sm:$0xf]
  %v3219 = vld [vmem:[%s3 + $0xb4] sm:$0xf]
  %v3220 = vld [vmem:[%s3 + $0xb8] sm:$0xf]
  %v3221 = vld [vmem:[%s3 + $0xbc] sm:$0xf]
  %v3222 = vld [vmem:[%s3 + $0xc0] sm:$0xf]
  %v3223 = vld [vmem:[%s3 + $0xc4] sm:$0xf]
  %v3224 = vld [vmem:[%s3 + $0xc8] sm:$0xf]
  %v3225 = vld [vmem:[%s3 + $0xcc] sm:$0xf]
  %v3226 = vld [vmem:[%s3 + $0xd0] sm:$0xf]
  %v3227 = vld [vmem:[%s3 + $0xd4] sm:$0xf]
  %v3228 = vld [vmem:[%s3 + $0xd8] sm:$0xf]
  %v3229 = vld [vmem:[%s3 + $0xdc] sm:$0xf]
  %v3230 = vld [vmem:[%s3 + $0xe0] sm:$0xf]
  %v3231 = vld [vmem:[%s3 + $0xe4] sm:$0xf]
  %v3232 = vld [vmem:[%s3 + $0xe8] sm:$0xf]
  %v3233 = vld [vmem:[%s3 + $0xec] sm:$0xf]
  %v3234 = vld [vmem:[%s3 + $0xf0] sm:$0xf]
  %v3235 = vld [vmem:[%s3 + $0xf4] sm:$0xf]
  %v3236 = vld [vmem:[%s3 + $0xf8] sm:$0xf]
  %v3237 = vld [vmem:[%s3 + $0xfc] sm:$0xf]
  %v3238 = vld [vmem:[%s3 + $0x100] sm:$0xf]
  %v3239 = vld [vmem:[%s3 + $0x104] sm:$0xf]
  %v3240 = vld [vmem:[%s3 + $0x108] sm:$0xf]
  %v3241 = vld [vmem:[%s3 + $0x10c] sm:$0xf]
  %v3242 = vld [vmem:[%s3 + $0x110] sm:$0xf]
  %v3243 = vld [vmem:[%s3 + $0x114] sm:$0xf]
  %v3244 = vld [vmem:[%s3 + $0x118] sm:$0xf]
  %v3245 = vld [vmem:[%s3 + $0x11c] sm:$0xf]
  %v3246 = vld [vmem:[%s3 + $0x120] sm:$0xf]
  %v3247 = vld [vmem:[%s3 + $0x124] sm:$0xf]
  %v3248 = vld [vmem:[%s3 + $0x128] sm:$0xf]
  %v3249 = vld [vmem:[%s3 + $0x12c] sm:$0xf]
  %v3250 = vld [vmem:[%s3 + $0x130] sm:$0xf]
  %v3251 = vld [vmem:[%s3 + $0x134] sm:$0xf]
  %v3252 = vld [vmem:[%s3 + $0x138] sm:$0xf]
  %v3253 = vld [vmem:[%s3 + $0x13c] sm:$0xf]
  %v3254 = vld [vmem:[%s3 + $0x140] sm:$0xf]
  %v3255 = vld [vmem:[%s3 + $0x144] sm:$0xf]
  %v3256 = vld [vmem:[%s3 + $0x148] sm:$0xf]
  %v3257 = vld [vmem:[%s3 + $0x14c] sm:$0xf]
  %v3258 = vld [vmem:[%s3 + $0x150] sm:$0xf]
  %v3259 = vld [vmem:[%s3 + $0x154] sm:$0xf]
  %v3260 = vld [vmem:[%s3 + $0x158] sm:$0xf]
  %v3261 = vld [vmem:[%s3 + $0x15c] sm:$0xf]
  %v3262 = vld [vmem:[%s3 + $0x160] sm:$0xf]
  %v3263 = vld [vmem:[%s3 + $0x164] sm:$0xf]
  %v3264 = vld [vmem:[%s3 + $0x168] sm:$0xf]
  %v3265 = vld [vmem:[%s3 + $0x16c] sm:$0xf]
  %v3266 = vld [vmem:[%s3 + $0x170] sm:$0xf]
  %v3267 = vld [vmem:[%s3 + $0x174] sm:$0xf]
  %v3268 = vld [vmem:[%s3 + $0x178] sm:$0xf]
  %v3269 = vld [vmem:[%s3 + $0x17c] sm:$0xf]
  %v3270 = vld [vmem:[%s3 + $0x180] sm:$0xf]
  %v3271 = vld [vmem:[%s3 + $0x184] sm:$0xf]
  %v3272 = vld [vmem:[%s3 + $0x188] sm:$0xf]
  %v3273 = vld [vmem:[%s3 + $0x18c] sm:$0xf]
  %v3274 = vld [vmem:[%s3 + $0x190] sm:$0xf]
  %v3275 = vld [vmem:[%s3 + $0x194] sm:$0xf]
  %v3276 = vld [vmem:[%s3 + $0x198] sm:$0xf]
  %v3277 = vld [vmem:[%s3 + $0x19c] sm:$0xf]
  %v3278 = vld [vmem:[%s3 + $0x1a0] sm:$0xf]
  %v3279 = vld [vmem:[%s3 + $0x1a4] sm:$0xf]
  %v3280 = vld [vmem:[%s3 + $0x1a8] sm:$0xf]
  %v3281 = vld [vmem:[%s3 + $0x1ac] sm:$0xf]
  %v3282 = vld [vmem:[%s3 + $0x1b0] sm:$0xf]
  %v3283 = vld [vmem:[%s3 + $0x1b4] sm:$0xf]
  %v3284 = vld [vmem:[%s3 + $0x1b8] sm:$0xf]
  %v3285 = vld [vmem:[%s3 + $0x1bc] sm:$0xf]
  %v3286 = vld [vmem:[%s3 + $0x1c0] sm:$0xf]
  %v3287 = vld [vmem:[%s3 + $0x1c4] sm:$0xf]
  %v3288 = vld [vmem:[%s3 + $0x1c8] sm:$0xf]
  %v3289 = vld [vmem:[%s3 + $0x1cc] sm:$0xf]
  %v3290 = vld [vmem:[%s3 + $0x1d0] sm:$0xf]
  %v3291 = vld [vmem:[%s3 + $0x1d4] sm:$0xf]
  %v3292 = vld [vmem:[%s3 + $0x1d8] sm:$0xf]
  %v3293 = vld [vmem:[%s3 + $0x1dc] sm:$0xf]
  %v3294 = vld [vmem:[%s3 + $0x1e0] sm:$0xf]
  %v3295 = vld [vmem:[%s3 + $0x1e4] sm:$0xf]
  %v3296 = vld [vmem:[%s3 + $0x1e8] sm:$0xf]
  %v3297 = vld [vmem:[%s3 + $0x1ec] sm:$0xf]
  %v3298 = vld [vmem:[%s3 + $0x1f0] sm:$0xf]
  %v3299 = vld [vmem:[%s3 + $0x1f4] sm:$0xf]
  %v3300 = vld [vmem:[%s3 + $0x1f8] sm:$0xf]
  %v3301 = vld [vmem:[%s3 + $0x1fc] sm:$0xf]
  %v3302 = vld [vmem:[%s4] sm:$0x1]
  %v3304 = vlaneseq
  %v3305 = vshrl.u32 %v3304, 7
  %v3306 = vsub.s32 0, %v3305
  %v3307 = vrot.slane %v3302, %v3306
  %v3437 = vunpack.c.l.b16 %v3174
  %v3438 = vunpack.c.l.b16 %v3175
  %v3439 = vunpack.c.l.b16 %v3176
  %v3440 = vunpack.c.l.b16 %v3177
  %v3441 = vunpack.c.l.b16 %v3178
  %v3442 = vunpack.c.l.b16 %v3179
  %v3443 = vunpack.c.l.b16 %v3180
  %v3444 = vunpack.c.l.b16 %v3181
  %v3445 = vunpack.c.l.b16 %v3182
  %v3446 = vunpack.c.l.b16 %v3183
  %v3447 = vunpack.c.l.b16 %v3184
  %v3448 = vunpack.c.l.b16 %v3185
  %v3449 = vunpack.c.l.b16 %v3186
  %v3450 = vunpack.c.l.b16 %v3187
  %v3451 = vunpack.c.l.b16 %v3188
  %v3452 = vunpack.c.l.b16 %v3189
  %v3453 = vunpack.c.l.b16 %v3190
  %v3454 = vunpack.c.l.b16 %v3191
  %v3455 = vunpack.c.l.b16 %v3192
  %v3456 = vunpack.c.l.b16 %v3193
  %v3457 = vunpack.c.l.b16 %v3194
  %v3458 = vunpack.c.l.b16 %v3195
  %v3459 = vunpack.c.l.b16 %v3196
  %v3460 = vunpack.c.l.b16 %v3197
  %v3461 = vunpack.c.l.b16 %v3198
  %v3462 = vunpack.c.l.b16 %v3199
  %v3463 = vunpack.c.l.b16 %v3200
  %v3464 = vunpack.c.l.b16 %v3201
  %v3465 = vunpack.c.l.b16 %v3202
  %v3466 = vunpack.c.l.b16 %v3203
  %v3467 = vunpack.c.l.b16 %v3204
  %v3468 = vunpack.c.l.b16 %v3205
  %v3469 = vunpack.c.l.b16 %v3206
  %v3470 = vunpack.c.l.b16 %v3207
  %v3471 = vunpack.c.l.b16 %v3208
  %v3472 = vunpack.c.l.b16 %v3209
  %v3473 = vunpack.c.l.b16 %v3210
  %v3474 = vunpack.c.l.b16 %v3211
  %v3475 = vunpack.c.l.b16 %v3212
  %v3476 = vunpack.c.l.b16 %v3213
  %v3477 = vunpack.c.l.b16 %v3214
  %v3478 = vunpack.c.l.b16 %v3215
  %v3479 = vunpack.c.l.b16 %v3216
  %v3480 = vunpack.c.l.b16 %v3217
  %v3481 = vunpack.c.l.b16 %v3218
  %v3482 = vunpack.c.l.b16 %v3219
  %v3483 = vunpack.c.l.b16 %v3220
  %v3484 = vunpack.c.l.b16 %v3221
  %v3485 = vunpack.c.l.b16 %v3222
  %v3486 = vunpack.c.l.b16 %v3223
  %v3487 = vunpack.c.l.b16 %v3224
  %v3488 = vunpack.c.l.b16 %v3225
  %v3489 = vunpack.c.l.b16 %v3226
  %v3490 = vunpack.c.l.b16 %v3227
  %v3491 = vunpack.c.l.b16 %v3228
  %v3492 = vunpack.c.l.b16 %v3229
  %v3493 = vunpack.c.l.b16 %v3230
  %v3494 = vunpack.c.l.b16 %v3231
  %v3495 = vunpack.c.l.b16 %v3232
  %v3496 = vunpack.c.l.b16 %v3233
  %v3497 = vunpack.c.l.b16 %v3234
  %v3498 = vunpack.c.l.b16 %v3235
  %v3499 = vunpack.c.l.b16 %v3236
  %v3500 = vunpack.c.l.b16 %v3237
  %v3501 = vunpack.c.l.b16 %v3238
  %v3502 = vunpack.c.l.b16 %v3239
  %v3503 = vunpack.c.l.b16 %v3240
  %v3504 = vunpack.c.l.b16 %v3241
  %v3505 = vunpack.c.l.b16 %v3242
  %v3506 = vunpack.c.l.b16 %v3243
  %v3507 = vunpack.c.l.b16 %v3244
  %v3508 = vunpack.c.l.b16 %v3245
  %v3509 = vunpack.c.l.b16 %v3246
  %v3510 = vunpack.c.l.b16 %v3247
  %v3511 = vunpack.c.l.b16 %v3248
  %v3512 = vunpack.c.l.b16 %v3249
  %v3513 = vunpack.c.l.b16 %v3250
  %v3514 = vunpack.c.l.b16 %v3251
  %v3515 = vunpack.c.l.b16 %v3252
  %v3516 = vunpack.c.l.b16 %v3253
  %v3517 = vunpack.c.l.b16 %v3254
  %v3518 = vunpack.c.l.b16 %v3255
  %v3519 = vunpack.c.l.b16 %v3256
  %v3520 = vunpack.c.l.b16 %v3257
  %v3521 = vunpack.c.l.b16 %v3258
  %v3522 = vunpack.c.l.b16 %v3259
  %v3523 = vunpack.c.l.b16 %v3260
  %v3524 = vunpack.c.l.b16 %v3261
  %v3525 = vunpack.c.l.b16 %v3262
  %v3526 = vunpack.c.l.b16 %v3263
  %v3527 = vunpack.c.l.b16 %v3264
  %v3528 = vunpack.c.l.b16 %v3265
  %v3529 = vunpack.c.l.b16 %v3266
  %v3530 = vunpack.c.l.b16 %v3267
  %v3531 = vunpack.c.l.b16 %v3268
  %v3532 = vunpack.c.l.b16 %v3269
  %v3533 = vunpack.c.l.b16 %v3270
  %v3534 = vunpack.c.l.b16 %v3271
  %v3535 = vunpack.c.l.b16 %v3272
  %v3536 = vunpack.c.l.b16 %v3273
  %v3537 = vunpack.c.l.b16 %v3274
  %v3538 = vunpack.c.l.b16 %v3275
  %v3539 = vunpack.c.l.b16 %v3276
  %v3540 = vunpack.c.l.b16 %v3277
  %v3541 = vunpack.c.l.b16 %v3278
  %v3542 = vunpack.c.l.b16 %v3279
  %v3543 = vunpack.c.l.b16 %v3280
  %v3544 = vunpack.c.l.b16 %v3281
  %v3545 = vunpack.c.l.b16 %v3282
  %v3546 = vunpack.c.l.b16 %v3283
  %v3547 = vunpack.c.l.b16 %v3284
  %v3548 = vunpack.c.l.b16 %v3285
  %v3549 = vunpack.c.l.b16 %v3286
  %v3550 = vunpack.c.l.b16 %v3287
  %v3551 = vunpack.c.l.b16 %v3288
  %v3552 = vunpack.c.l.b16 %v3289
  %v3553 = vunpack.c.l.b16 %v3290
  %v3554 = vunpack.c.l.b16 %v3291
  %v3555 = vunpack.c.l.b16 %v3292
  %v3556 = vunpack.c.l.b16 %v3293
  %v3557 = vunpack.c.l.b16 %v3294
  %v3558 = vunpack.c.l.b16 %v3295
  %v3559 = vunpack.c.l.b16 %v3296
  %v3560 = vunpack.c.l.b16 %v3297
  %v3561 = vunpack.c.l.b16 %v3298
  %v3562 = vunpack.c.l.b16 %v3299
  %v3563 = vunpack.c.l.b16 %v3300
  %v3564 = vunpack.c.l.b16 %v3301
  %v3565 = vpack.c.b16 %v3438, %v3437
  %v3566 = vpack.c.b16 %v3440, %v3439
  %v3567 = vpack.c.b16 %v3442, %v3441
  %v3568 = vpack.c.b16 %v3444, %v3443
  %v3569 = vpack.c.b16 %v3446, %v3445
  %v3570 = vpack.c.b16 %v3448, %v3447
  %v3571 = vpack.c.b16 %v3450, %v3449
  %v3572 = vpack.c.b16 %v3452, %v3451
  %v3573 = vpack.c.b16 %v3454, %v3453
  %v3574 = vpack.c.b16 %v3456, %v3455
  %v3575 = vpack.c.b16 %v3458, %v3457
  %v3576 = vpack.c.b16 %v3460, %v3459
  %v3577 = vpack.c.b16 %v3462, %v3461
  %v3578 = vpack.c.b16 %v3464, %v3463
  %v3579 = vpack.c.b16 %v3466, %v3465
  %v3580 = vpack.c.b16 %v3468, %v3467
  %v3581 = vpack.c.b16 %v3470, %v3469
  %v3582 = vpack.c.b16 %v3472, %v3471
  %v3583 = vpack.c.b16 %v3474, %v3473
  %v3584 = vpack.c.b16 %v3476, %v3475
  %v3585 = vpack.c.b16 %v3478, %v3477
  %v3586 = vpack.c.b16 %v3480, %v3479
  %v3587 = vpack.c.b16 %v3482, %v3481
  %v3588 = vpack.c.b16 %v3484, %v3483
  %v3589 = vpack.c.b16 %v3486, %v3485
  %v3590 = vpack.c.b16 %v3488, %v3487
  %v3591 = vpack.c.b16 %v3490, %v3489
  %v3592 = vpack.c.b16 %v3492, %v3491
  %v3593 = vpack.c.b16 %v3494, %v3493
  %v3594 = vpack.c.b16 %v3496, %v3495
  %v3595 = vpack.c.b16 %v3498, %v3497
  %v3596 = vpack.c.b16 %v3500, %v3499
  %v3597 = vpack.c.b16 %v3502, %v3501
  %v3598 = vpack.c.b16 %v3504, %v3503
  %v3599 = vpack.c.b16 %v3506, %v3505
  %v3600 = vpack.c.b16 %v3508, %v3507
  %v3601 = vpack.c.b16 %v3510, %v3509
  %v3602 = vpack.c.b16 %v3512, %v3511
  %v3603 = vpack.c.b16 %v3514, %v3513
  %v3604 = vpack.c.b16 %v3516, %v3515
  %v3605 = vpack.c.b16 %v3518, %v3517
  %v3606 = vpack.c.b16 %v3520, %v3519
  %v3607 = vpack.c.b16 %v3522, %v3521
  %v3608 = vpack.c.b16 %v3524, %v3523
  %v3609 = vpack.c.b16 %v3526, %v3525
  %v3610 = vpack.c.b16 %v3528, %v3527
  %v3611 = vpack.c.b16 %v3530, %v3529
  %v3612 = vpack.c.b16 %v3532, %v3531
  %v3613 = vpack.c.b16 %v3534, %v3533
  %v3614 = vpack.c.b16 %v3536, %v3535
  %v3615 = vpack.c.b16 %v3538, %v3537
  %v3616 = vpack.c.b16 %v3540, %v3539
  %v3617 = vpack.c.b16 %v3542, %v3541
  %v3618 = vpack.c.b16 %v3544, %v3543
  %v3619 = vpack.c.b16 %v3546, %v3545
  %v3620 = vpack.c.b16 %v3548, %v3547
  %v3621 = vpack.c.b16 %v3550, %v3549
  %v3622 = vpack.c.b16 %v3552, %v3551
  %v3623 = vpack.c.b16 %v3554, %v3553
  %v3624 = vpack.c.b16 %v3556, %v3555
  %v3625 = vpack.c.b16 %v3558, %v3557
  %v3626 = vpack.c.b16 %v3560, %v3559
  %v3627 = vpack.c.b16 %v3562, %v3561
  %v3628 = vpack.c.b16 %v3564, %v3563
  %3693 = vmatprep.subr.bf16.mxu0 0
  %3694 = vmatpush1.bf16.msra.mxu0 %v3565
  %3695 = vmatprep.subr.bf16.mxu0 0
  %3696 = vmatpush1.bf16.msra.mxu0 %v3566
  %3697 = vmatprep.subr.bf16.mxu0 0
  %3698 = vmatpush1.bf16.msra.mxu0 %v3567
  %3699 = vmatprep.subr.bf16.mxu0 0
  %3700 = vmatpush1.bf16.msra.mxu0 %v3568
  %3701 = vmatprep.subr.bf16.mxu0 0
  %3702 = vmatpush1.bf16.msra.mxu0 %v3569
  %3703 = vmatprep.subr.bf16.mxu0 0
  %3704 = vmatpush1.bf16.msra.mxu0 %v3570
  %3705 = vmatprep.subr.bf16.mxu0 0
  %3706 = vmatpush1.bf16.msra.mxu0 %v3571
  %3707 = vmatprep.subr.bf16.mxu0 0
  %3708 = vmatpush1.bf16.msra.mxu0 %v3572
  %3709 = vmatprep.subr.bf16.mxu0 0
  %3710 = vmatpush1.bf16.msra.mxu0 %v3573
  %3711 = vmatprep.subr.bf16.mxu0 0
  %3712 = vmatpush1.bf16.msra.mxu0 %v3574
  %3713 = vmatprep.subr.bf16.mxu0 0
  %3714 = vmatpush1.bf16.msra.mxu0 %v3575
  %3715 = vmatprep.subr.bf16.mxu0 0
  %3716 = vmatpush1.bf16.msra.mxu0 %v3576
  %3717 = vmatprep.subr.bf16.mxu0 0
  %3718 = vmatpush1.bf16.msra.mxu0 %v3577
  %3719 = vmatprep.subr.bf16.mxu0 0
  %3720 = vmatpush1.bf16.msra.mxu0 %v3578
  %3721 = vmatprep.subr.bf16.mxu0 0
  %3722 = vmatpush1.bf16.msra.mxu0 %v3579
  %3723 = vmatprep.subr.bf16.mxu0 0
  %3724 = vmatpush1.bf16.msra.mxu0 %v3580
  %3725 = vmatprep.mubr.bf16.mxu0 %v3167
  %3726 = vmatmul.mubr.bf16.gmra.mrb[0].mxu0 %v3166
  %v3727 = vpop.f32.mrb[0].mxu0
  %v3728 = vadd.f32 %v3307, %v3727
  %v3729 = vpop.f32.mrb[0].mxu0
  %v3730 = vpop.f32.mrb[0].mxu0
  %v3731 = vadd.f32 %v3307, %v3730
  %v3732 = vpop.f32.mrb[0].mxu0
  %3733 = vdwg.mxu0
  %3734 = vmatprep.subr.bf16.mxu0 0
  %3735 = vmatpush1.bf16.msra.mxu0 %v3581
  %3736 = vmatprep.subr.bf16.mxu0 0
  %3737 = vmatpush1.bf16.msra.mxu0 %v3582
  %3738 = vmatprep.subr.bf16.mxu0 0
  %3739 = vmatpush1.bf16.msra.mxu0 %v3583
  %3740 = vmatprep.subr.bf16.mxu0 0
  %3741 = vmatpush1.bf16.msra.mxu0 %v3584
  %3742 = vmatprep.subr.bf16.mxu0 0
  %3743 = vmatpush1.bf16.msra.mxu0 %v3585
  %3744 = vmatprep.subr.bf16.mxu0 0
  %3745 = vmatpush1.bf16.msra.mxu0 %v3586
  %3746 = vmatprep.subr.bf16.mxu0 0
  %3747 = vmatpush1.bf16.msra.mxu0 %v3587
  %3748 = vmatprep.subr.bf16.mxu0 0
  %3749 = vmatpush1.bf16.msra.mxu0 %v3588
  %3750 = vmatprep.subr.bf16.mxu0 0
  %3751 = vmatpush1.bf16.msra.mxu0 %v3589
  %3752 = vmatprep.subr.bf16.mxu0 0
  %3753 = vmatpush1.bf16.msra.mxu0 %v3590
  %3754 = vmatprep.subr.bf16.mxu0 0
  %3755 = vmatpush1.bf16.msra.mxu0 %v3591
  %3756 = vmatprep.subr.bf16.mxu0 0
  %3757 = vmatpush1.bf16.msra.mxu0 %v3592
  %3758 = vmatprep.subr.bf16.mxu0 0
  %3759 = vmatpush1.bf16.msra.mxu0 %v3593
  %3760 = vmatprep.subr.bf16.mxu0 0
  %3761 = vmatpush1.bf16.msra.mxu0 %v3594
  %3762 = vmatprep.subr.bf16.mxu0 0
  %3763 = vmatpush1.bf16.msra.mxu0 %v3595
  %3764 = vmatprep.subr.bf16.mxu0 0
  %3765 = vmatpush1.bf16.msra.mxu0 %v3596
  %3766 = vmatprep.mubr.bf16.mxu0 %v3169
  %3767 = vmatmul.mubr.bf16.gmra.mrb[0].mxu0 %v3168
  %v3768 = vpop.f32.mrb[0].mxu0
  %v3769 = vadd.f32 %v3728, %v3768
  %v3770 = vpop.f32.mrb[0].mxu0
  %v3771 = vpop.f32.mrb[0].mxu0
  %v3772 = vadd.f32 %v3731, %v3771
  %v3773 = vpop.f32.mrb[0].mxu0
  %3774 = vdwg.mxu0
  %3775 = vmatprep.subr.bf16.mxu0 0
  %3776 = vmatpush1.bf16.msra.mxu0 %v3597
  %3777 = vmatprep.subr.bf16.mxu0 0
  %3778 = vmatpush1.bf16.msra.mxu0 %v3598
  %3779 = vmatprep.subr.bf16.mxu0 0
  %3780 = vmatpush1.bf16.msra.mxu0 %v3599
  %3781 = vmatprep.subr.bf16.mxu0 0
  %3782 = vmatpush1.bf16.msra.mxu0 %v3600
  %3783 = vmatprep.subr.bf16.mxu0 0
  %3784 = vmatpush1.bf16.msra.mxu0 %v3601
  %3785 = vmatprep.subr.bf16.mxu0 0
  %3786 = vmatpush1.bf16.msra.mxu0 %v3602
  %3787 = vmatprep.subr.bf16.mxu0 0
  %3788 = vmatpush1.bf16.msra.mxu0 %v3603
  %3789 = vmatprep.subr.bf16.mxu0 0
  %3790 = vmatpush1.bf16.msra.mxu0 %v3604
  %3791 = vmatprep.subr.bf16.mxu0 0
  %3792 = vmatpush1.bf16.msra.mxu0 %v3605
  %3793 = vmatprep.subr.bf16.mxu0 0
  %3794 = vmatpush1.bf16.msra.mxu0 %v3606
  %3795 = vmatprep.subr.bf16.mxu0 0
  %3796 = vmatpush1.bf16.msra.mxu0 %v3607
  %3797 = vmatprep.subr.bf16.mxu0 0
  %3798 = vmatpush1.bf16.msra.mxu0 %v3608
  %3799 = vmatprep.subr.bf16.mxu0 0
  %3800 = vmatpush1.bf16.msra.mxu0 %v3609
  %3801 = vmatprep.subr.bf16.mxu0 0
  %3802 = vmatpush1.bf16.msra.mxu0 %v3610
  %3803 = vmatprep.subr.bf16.mxu0 0
  %3804 = vmatpush1.bf16.msra.mxu0 %v3611
  %3805 = vmatprep.subr.bf16.mxu0 0
  %3806 = vmatpush1.bf16.msra.mxu0 %v3612
  %3807 = vmatprep.mubr.bf16.mxu0 %v3171
  %3808 = vmatmul.mubr.bf16.gmra.mrb[0].mxu0 %v3170
  %v3809 = vpop.f32.mrb[0].mxu0
  %v3810 = vadd.f32 %v3769, %v3809
  %v3811 = vpop.f32.mrb[0].mxu0
  %v3812 = vpop.f32.mrb[0].mxu0
  %v3813 = vadd.f32 %v3772, %v3812
  %v3814 = vpop.f32.mrb[0].mxu0
  %3815 = vdwg.mxu0
  %3816 = vmatprep.subr.bf16.mxu0 0
  %3817 = vmatpush1.bf16.msra.mxu0 %v3613
  %3818 = vmatprep.subr.bf16.mxu0 0
  %3819 = vmatpush1.bf16.msra.mxu0 %v3614
  %3820 = vmatprep.subr.bf16.mxu0 0
  %3821 = vmatpush1.bf16.msra.mxu0 %v3615
  %3822 = vmatprep.subr.bf16.mxu0 0
  %3823 = vmatpush1.bf16.msra.mxu0 %v3616
  %3824 = vmatprep.subr.bf16.mxu0 0
  %3825 = vmatpush1.bf16.msra.mxu0 %v3617
  %3826 = vmatprep.subr.bf16.mxu0 0
  %3827 = vmatpush1.bf16.msra.mxu0 %v3618
  %3828 = vmatprep.subr.bf16.mxu0 0
  %3829 = vmatpush1.bf16.msra.mxu0 %v3619
  %3830 = vmatprep.subr.bf16.mxu0 0
  %3831 = vmatpush1.bf16.msra.mxu0 %v3620
  %3832 = vmatprep.subr.bf16.mxu0 0
  %3833 = vmatpush1.bf16.msra.mxu0 %v3621
  %3834 = vmatprep.subr.bf16.mxu0 0
  %3835 = vmatpush1.bf16.msra.mxu0 %v3622
  %3836 = vmatprep.subr.bf16.mxu0 0
  %3837 = vmatpush1.bf16.msra.mxu0 %v3623
  %3838 = vmatprep.subr.bf16.mxu0 0
  %3839 = vmatpush1.bf16.msra.mxu0 %v3624
  %3840 = vmatprep.subr.bf16.mxu0 0
  %3841 = vmatpush1.bf16.msra.mxu0 %v3625
  %3842 = vmatprep.subr.bf16.mxu0 0
  %3843 = vmatpush1.bf16.msra.mxu0 %v3626
  %3844 = vmatprep.subr.bf16.mxu0 0
  %3845 = vmatpush1.bf16.msra.mxu0 %v3627
  %3846 = vmatprep.subr.bf16.mxu0 0
  %3847 = vmatpush1.bf16.msra.mxu0 %v3628
  %3848 = vmatprep.mubr.bf16.mxu0 %v3173
  %3849 = vmatmul.mubr.bf16.gmra.mrb[0].mxu0 %v3172
  %v3850 = vpop.f32.mrb[0].mxu0
  %v3851 = vadd.f32 %v3810, %v3850
  %v3852 = vpop.f32.mrb[0].mxu0
  %v3853 = vpop.f32.mrb[0].mxu0
  %v3854 = vadd.f32 %v3813, %v3853
  %v3855 = vpop.f32.mrb[0].mxu0
  %3856 = vdwg.mxu0
  %3857 = vst [vmem:[%s5] sm:$0xff] %v3851
  %3858 = vst [vmem:[%s5 + $0x8] sm:$0xff] %v3854
  // Predicated region
  $region22: #{student_model_forward.1} parent=0 // pred_check
    _
  $region23: #{student_model_forward.1} parent=0 // pred_check_branch
    %3860 = sbr.rel (0) target = $region25
  $region24: #{student_model_forward.1} parent=0 // pred_region
    _
  $region25: #{student_model_forward.1} parent=0 // pred_fallthru
    _
  // Predicated region
  $region26: #{student_model_forward.1} parent=0 // pred_check
    _
  $region27: #{student_model_forward.1} parent=0 // pred_check_branch
    %3862 = sbr.rel (0) target = $region29
  $region28: #{student_model_forward.1} parent=0 // pred_region
    _
  $region29: #{student_model_forward.1} parent=0 // pred_fallthru
    _

</llo_original>
